<compile_context>
chip_gen: v7x
topology: tpu7x:2x2x1
jax: 0.10.0
libtpu: 0.0.40
codegen_flags: <defaults>
</compile_context>

<pallas_src>
import functools

import jax
import jax.numpy as jnp
from jax.experimental import pallas as pl
from jax.experimental.pallas import tpu as pltpu


def _round_up(x, m):
    return ((x + m - 1) // m) * m


# --------------------------- fused encoder kernel ---------------------------
def sentence_encoder_kernel(ids_ref,      # VMEM (S*B, 1)  int32 time-major ids
                            embed_ref,    # VMEM (Vp, Hp)  f32 (row 0 == 0)
                            w_ref,        # VMEM (Hp, 4Hp) f32 fused input->gate
                            u_ref,        # VMEM (Hp, 4Hp) f32 fused hidden->gate
                            b_ref,        # VMEM (1, 4Hp)  f32 fused bias
                            ht_ref):      # VMEM (B, H)    f32 final hidden state
    SB = ids_ref.shape[0]
    Vp, Hp = embed_ref.shape
    B, H = ht_ref.shape
    S = SB // B

    # ---- embedding lookup as a one-hot MXU matmul (no dynamic slicing) ----
    ids = ids_ref[...]                                            # (SB, 1)
    vocab_iota = jax.lax.broadcasted_iota(jnp.int32, (SB, Vp), 1)
    onehot = (ids == vocab_iota).astype(jnp.float32)              # (SB, Vp)
    x = jnp.dot(onehot, embed_ref[...],
                preferred_element_type=jnp.float32)               # (SB, Hp)

    # ---- input projection hoisted out of the recurrence ----
    # one (S*B, Hp) @ (Hp, 4Hp) matmul + one bias broadcast for all timesteps
    xw = (jnp.dot(x, w_ref[...], preferred_element_type=jnp.float32)
          + b_ref[...])                                           # (SB, 4Hp)

    u = u_ref[...]
    h = jnp.zeros((B, Hp), jnp.float32)
    c = jnp.zeros((B, Hp), jnp.float32)

    # ---- recurrence, statically unrolled (only h @ U is serial) ----
    for t in range(S):
        gates = xw[t * B:(t + 1) * B, :] + jnp.dot(
            h, u, preferred_element_type=jnp.float32)             # (B, 4Hp)
        # gate layout [i | f | g | o]; each slice is a full 128-lane vreg group
        i = jax.nn.sigmoid(gates[:, 0:Hp])
        f = jax.nn.sigmoid(gates[:, Hp:2 * Hp])
        g = jnp.tanh(gates[:, 2 * Hp:3 * Hp])
        o = jax.nn.sigmoid(gates[:, 3 * Hp:4 * Hp])
        c = f * c + i * g
        h = o * jnp.tanh(c)

    # padded lanes of h are exactly 0; store only the logical hidden width
    ht_ref[...] = h[:, :H].astype(ht_ref.dtype)


def sentence_encoder_forward(tokens, embed_p, w_p, u_p, b_p, *, hidden):
    """tokens: (B, S) int32 -> (B, hidden) f32  (== ht.squeeze())."""
    B, S = tokens.shape
    # time-major flat ids: row r = s*B + b  ==> tokens[b, s]
    ids_flat = tokens.astype(jnp.int32).T.reshape(S * B, 1)
    vmem = pl.BlockSpec(memory_space=pltpu.MemorySpace.VMEM)
    return pl.pallas_call(
        sentence_encoder_kernel,
        out_shape=jax.ShapeDtypeStruct((B, hidden), jnp.float32),
        in_specs=[vmem, vmem, vmem, vmem, vmem],
        out_specs=vmem,
    )(ids_flat, embed_p, w_p, u_p, b_p)


# ------------------------------ parameters ----------------------------------
def init_params(key, vocab_size, cfg_hidden):
    """PyTorch-style init; returns (packed-for-kernel, raw-for-reference, H)."""
    H = cfg_hidden + 1                     # module adds +1 to hidden_size
    Hp = _round_up(H, 128)                 # full-lane padded hidden width
    Vp = _round_up(vocab_size, 128)        # padded vocab (one-hot contraction)
    ks = jax.random.split(key, 5)

    # nn.Embedding: N(0,1), max_norm=1.0 renorm, padding_idx=0
    # TODO(synk): PyTorch applies max_norm at lookup time (mutating weights);
    # applying it once at init is equivalent for a frozen forward pass.
    embed = jax.random.normal(ks[0], (vocab_size, H), jnp.float32)
    norms = jnp.linalg.norm(embed, axis=-1, keepdims=True)
    embed = embed * jnp.minimum(1.0, 1.0 / jnp.maximum(norms, 1e-12))
    embed = embed.at[0].set(0.0)

    # nn.LSTM: U(-1/sqrt(H), 1/sqrt(H)), gate order (i, f, g, o)
    k = 1.0 / jnp.sqrt(jnp.float32(H))
    w_ih = jax.random.uniform(ks[1], (4 * H, H), jnp.float32, -k, k)
    w_hh = jax.random.uniform(ks[2], (4 * H, H), jnp.float32, -k, k)
    b_ih = jax.random.uniform(ks[3], (4 * H,), jnp.float32, -k, k)
    b_hh = jax.random.uniform(ks[4], (4 * H,), jnp.float32, -k, k)

    # ---- pack into padded, fused, transposed layout for the kernel ----
    embed_p = jnp.zeros((Vp, Hp), jnp.float32).at[:vocab_size, :H].set(embed)
    w_p = jnp.zeros((Hp, 4 * Hp), jnp.float32)
    u_p = jnp.zeros((Hp, 4 * Hp), jnp.float32)
    b_p = jnp.zeros((1, 4 * Hp), jnp.float32)
    for g in range(4):
        w_p = w_p.at[:H, g * Hp:g * Hp + H].set(w_ih[g * H:(g + 1) * H, :].T)
        u_p = u_p.at[:H, g * Hp:g * Hp + H].set(w_hh[g * H:(g + 1) * H, :].T)
        b_p = b_p.at[0, g * Hp:g * Hp + H].set(
            b_ih[g * H:(g + 1) * H] + b_hh[g * H:(g + 1) * H])

    packed = dict(embed=embed_p, w=w_p, u=u_p, b=b_p)
    raw = dict(embed=embed, w_ih=w_ih, w_hh=w_hh, b_ih=b_ih, b_hh=b_hh)
    return packed, raw, H


# --------------------------- plain-JAX reference -----------------------------
def reference_forward(tokens, raw):
    embed, w_ih, w_hh = raw["embed"], raw["w_ih"], raw["w_hh"]
    b_ih, b_hh = raw["b_ih"], raw["b_hh"]
    H = embed.shape[1]
    emb = jnp.take(embed, tokens, axis=0)                     # (B, S, H)
    B, S, _ = emb.shape
    h = jnp.zeros((B, H), jnp.float32)
    c = jnp.zeros((B, H), jnp.float32)
    for t in range(S):
        x_t = emb[:, t, :]
        gates = x_t @ w_ih.T + b_ih + h @ w_hh.T + b_hh       # (B, 4H)
        i = jax.nn.sigmoid(gates[:, 0:H])
        f = jax.nn.sigmoid(gates[:, H:2 * H])
        g = jnp.tanh(gates[:, 2 * H:3 * H])
        o = jax.nn.sigmoid(gates[:, 3 * H:4 * H])
        c = f * c + i * g
        h = o * jnp.tanh(c)
    return h


# ------------------------------------ main -----------------------------------
if __name__ == "__main__":
    cfg = {"vocab_size": 50, "hidden_size": 32}   # actual LSTM width H = 33
    B, S = 2, 8

    key = jax.random.PRNGKey(0)
    pkey, dkey = jax.random.split(key)
    packed, raw, H = init_params(pkey, cfg["vocab_size"], cfg["hidden_size"])

    tokens = jax.random.randint(dkey, (B, S), 0, cfg["vocab_size"],
                                dtype=jnp.int32)

    fwd = jax.jit(functools.partial(sentence_encoder_forward, hidden=H))
    ht = fwd(tokens, packed["embed"], packed["w"], packed["u"], packed["b"])
    jax.block_until_ready(ht)

    ref = reference_forward(tokens, raw)
    assert ht.shape == (B, H)
    assert bool(jnp.allclose(ht, ref, atol=2e-2, rtol=2e-2)), (
        "max abs diff = %f" % float(jnp.max(jnp.abs(ht - ref))))

    print("KERNEL_OK")
</pallas_src>

<mosaic_0001>
module attributes {stable_mosaic.version = 11 : i64} {
  func.func @sentence_encoder_kernel(%arg0: memref<16x1xi32, #tpu.memory_space<vmem>>, %arg1: memref<128x128xf32, #tpu.memory_space<vmem>>, %arg2: memref<128x512xf32, #tpu.memory_space<vmem>>, %arg3: memref<128x512xf32, #tpu.memory_space<vmem>>, %arg4: memref<1x512xf32, #tpu.memory_space<vmem>>, %arg5: memref<2x33xf32, #tpu.memory_space<vmem>>) attributes {dimension_semantics = [], scalar_prefetch = 0 : i64, scratch_operands = 0 : i64, tpu.core_type = #tpu.core_type<tc>} {
    %c0 = arith.constant 0 : index
    %c0_0 = arith.constant 0 : index
    %0 = vector.load %arg0[%c0, %c0_0] : memref<16x1xi32, #tpu.memory_space<vmem>>, vector<16x1xi32>
    %1 = tpu.iota {dimensions = array<i32: 1>} : vector<16x128xi32>
    %2 = vector.broadcast %0 : vector<16x1xi32> to vector<16x128xi32>
    %3 = arith.cmpi eq, %2, %1 : vector<16x128xi32>
    %4 = arith.extui %3 : vector<16x128xi1> to vector<16x128xi32>
    %5 = arith.sitofp %4 : vector<16x128xi32> to vector<16x128xf32>
    %c0_1 = arith.constant 0 : index
    %c0_2 = arith.constant 0 : index
    %6 = vector.load %arg1[%c0_1, %c0_2] : memref<128x128xf32, #tpu.memory_space<vmem>>, vector<128x128xf32>
    %cst = arith.constant dense<0.000000e+00> : vector<16x128xf32>
    %7 = tpu.matmul %5, %6, %cst {dimension_numbers = #tpu.dot_dimension_numbers<[1], [0], [0], [1], [0, 0, 1, 1], [], []>} : vector<16x128xf32>, vector<128x128xf32>, vector<16x128xf32> -> vector<16x128xf32>
    %c0_3 = arith.constant 0 : index
    %c0_4 = arith.constant 0 : index
    %8 = vector.load %arg2[%c0_3, %c0_4] : memref<128x512xf32, #tpu.memory_space<vmem>>, vector<128x512xf32>
    %cst_5 = arith.constant dense<0.000000e+00> : vector<16x512xf32>
    %9 = tpu.matmul %7, %8, %cst_5 {dimension_numbers = #tpu.dot_dimension_numbers<[1], [0], [0], [1], [0, 0, 1, 1], [], []>} : vector<16x128xf32>, vector<128x512xf32>, vector<16x512xf32> -> vector<16x512xf32>
    %c0_6 = arith.constant 0 : index
    %c0_7 = arith.constant 0 : index
    %10 = vector.load %arg4[%c0_6, %c0_7] : memref<1x512xf32, #tpu.memory_space<vmem>>, vector<1x512xf32>
    %11 = vector.broadcast %10 : vector<1x512xf32> to vector<16x512xf32>
    %12 = arith.addf %9, %11 : vector<16x512xf32>
    %c0_8 = arith.constant 0 : index
    %c0_9 = arith.constant 0 : index
    %13 = vector.load %arg3[%c0_8, %c0_9] : memref<128x512xf32, #tpu.memory_space<vmem>>, vector<128x512xf32>
    %cst_10 = arith.constant 0.000000e+00 : f32
    %14 = vector.broadcast %cst_10 : f32 to vector<2x128xf32>
    %cst_11 = arith.constant 0.000000e+00 : f32
    %15 = vector.broadcast %cst_11 : f32 to vector<2x128xf32>
    %16 = vector.extract_strided_slice %12 {offsets = [0, 0], sizes = [2, 512], strides = [1, 1]} : vector<16x512xf32> to vector<2x512xf32>
    %cst_12 = arith.constant dense<0.000000e+00> : vector<2x512xf32>
    %17 = tpu.matmul %14, %13, %cst_12 {dimension_numbers = #tpu.dot_dimension_numbers<[1], [0], [0], [1], [0, 0, 1, 1], [], []>} : vector<2x128xf32>, vector<128x512xf32>, vector<2x512xf32> -> vector<2x512xf32>
    %18 = arith.addf %16, %17 : vector<2x512xf32>
    %19 = vector.extract_strided_slice %18 {offsets = [0, 0], sizes = [2, 128], strides = [1, 1]} : vector<2x512xf32> to vector<2x128xf32>
    %20 = arith.negf %19 : vector<2x128xf32>
    %21 = math.exp %20 : vector<2x128xf32>
    %cst_13 = arith.constant 1.000000e+00 : f32
    %22 = vector.broadcast %cst_13 : f32 to vector<2x128xf32>
    %23 = arith.addf %22, %21 : vector<2x128xf32>
    %24 = arith.divf %22, %23 : vector<2x128xf32>
    %25 = vector.extract_strided_slice %18 {offsets = [0, 128], sizes = [2, 128], strides = [1, 1]} : vector<2x512xf32> to vector<2x128xf32>
    %26 = arith.negf %25 : vector<2x128xf32>
    %27 = math.exp %26 : vector<2x128xf32>
    %cst_14 = arith.constant 1.000000e+00 : f32
    %28 = vector.broadcast %cst_14 : f32 to vector<2x128xf32>
    %29 = arith.addf %28, %27 : vector<2x128xf32>
    %30 = arith.divf %28, %29 : vector<2x128xf32>
    %31 = vector.extract_strided_slice %18 {offsets = [0, 256], sizes = [2, 128], strides = [1, 1]} : vector<2x512xf32> to vector<2x128xf32>
    %32 = math.tanh %31 : vector<2x128xf32>
    %33 = vector.extract_strided_slice %18 {offsets = [0, 384], sizes = [2, 128], strides = [1, 1]} : vector<2x512xf32> to vector<2x128xf32>
    %34 = arith.negf %33 : vector<2x128xf32>
    %35 = math.exp %34 : vector<2x128xf32>
    %cst_15 = arith.constant 1.000000e+00 : f32
    %36 = vector.broadcast %cst_15 : f32 to vector<2x128xf32>
    %37 = arith.addf %36, %35 : vector<2x128xf32>
    %38 = arith.divf %36, %37 : vector<2x128xf32>
    %39 = arith.mulf %30, %15 : vector<2x128xf32>
    %40 = arith.mulf %24, %32 : vector<2x128xf32>
    %41 = arith.addf %39, %40 : vector<2x128xf32>
    %42 = math.tanh %41 : vector<2x128xf32>
    %43 = arith.mulf %38, %42 : vector<2x128xf32>
    %44 = vector.extract_strided_slice %12 {offsets = [2, 0], sizes = [2, 512], strides = [1, 1]} : vector<16x512xf32> to vector<2x512xf32>
    %cst_16 = arith.constant dense<0.000000e+00> : vector<2x512xf32>
    %45 = tpu.matmul %43, %13, %cst_16 {dimension_numbers = #tpu.dot_dimension_numbers<[1], [0], [0], [1], [0, 0, 1, 1], [], []>} : vector<2x128xf32>, vector<128x512xf32>, vector<2x512xf32> -> vector<2x512xf32>
    %46 = arith.addf %44, %45 : vector<2x512xf32>
    %47 = vector.extract_strided_slice %46 {offsets = [0, 0], sizes = [2, 128], strides = [1, 1]} : vector<2x512xf32> to vector<2x128xf32>
    %48 = arith.negf %47 : vector<2x128xf32>
    %49 = math.exp %48 : vector<2x128xf32>
    %cst_17 = arith.constant 1.000000e+00 : f32
    %50 = vector.broadcast %cst_17 : f32 to vector<2x128xf32>
    %51 = arith.addf %50, %49 : vector<2x128xf32>
    %52 = arith.divf %50, %51 : vector<2x128xf32>
    %53 = vector.extract_strided_slice %46 {offsets = [0, 128], sizes = [2, 128], strides = [1, 1]} : vector<2x512xf32> to vector<2x128xf32>
    %54 = arith.negf %53 : vector<2x128xf32>
    %55 = math.exp %54 : vector<2x128xf32>
    %cst_18 = arith.constant 1.000000e+00 : f32
    %56 = vector.broadcast %cst_18 : f32 to vector<2x128xf32>
    %57 = arith.addf %56, %55 : vector<2x128xf32>
    %58 = arith.divf %56, %57 : vector<2x128xf32>
    %59 = vector.extract_strided_slice %46 {offsets = [0, 256], sizes = [2, 128], strides = [1, 1]} : vector<2x512xf32> to vector<2x128xf32>
    %60 = math.tanh %59 : vector<2x128xf32>
    %61 = vector.extract_strided_slice %46 {offsets = [0, 384], sizes = [2, 128], strides = [1, 1]} : vector<2x512xf32> to vector<2x128xf32>
    %62 = arith.negf %61 : vector<2x128xf32>
    %63 = math.exp %62 : vector<2x128xf32>
    %cst_19 = arith.constant 1.000000e+00 : f32
    %64 = vector.broadcast %cst_19 : f32 to vector<2x128xf32>
    %65 = arith.addf %64, %63 : vector<2x128xf32>
    %66 = arith.divf %64, %65 : vector<2x128xf32>
    %67 = arith.mulf %58, %41 : vector<2x128xf32>
    %68 = arith.mulf %52, %60 : vector<2x128xf32>
    %69 = arith.addf %67, %68 : vector<2x128xf32>
    %70 = math.tanh %69 : vector<2x128xf32>
    %71 = arith.mulf %66, %70 : vector<2x128xf32>
    %72 = vector.extract_strided_slice %12 {offsets = [4, 0], sizes = [2, 512], strides = [1, 1]} : vector<16x512xf32> to vector<2x512xf32>
    %cst_20 = arith.constant dense<0.000000e+00> : vector<2x512xf32>
    %73 = tpu.matmul %71, %13, %cst_20 {dimension_numbers = #tpu.dot_dimension_numbers<[1], [0], [0], [1], [0, 0, 1, 1], [], []>} : vector<2x128xf32>, vector<128x512xf32>, vector<2x512xf32> -> vector<2x512xf32>
    %74 = arith.addf %72, %73 : vector<2x512xf32>
    %75 = vector.extract_strided_slice %74 {offsets = [0, 0], sizes = [2, 128], strides = [1, 1]} : vector<2x512xf32> to vector<2x128xf32>
    %76 = arith.negf %75 : vector<2x128xf32>
    %77 = math.exp %76 : vector<2x128xf32>
    %cst_21 = arith.constant 1.000000e+00 : f32
    %78 = vector.broadcast %cst_21 : f32 to vector<2x128xf32>
    %79 = arith.addf %78, %77 : vector<2x128xf32>
    %80 = arith.divf %78, %79 : vector<2x128xf32>
    %81 = vector.extract_strided_slice %74 {offsets = [0, 128], sizes = [2, 128], strides = [1, 1]} : vector<2x512xf32> to vector<2x128xf32>
    %82 = arith.negf %81 : vector<2x128xf32>
    %83 = math.exp %82 : vector<2x128xf32>
    %cst_22 = arith.constant 1.000000e+00 : f32
    %84 = vector.broadcast %cst_22 : f32 to vector<2x128xf32>
    %85 = arith.addf %84, %83 : vector<2x128xf32>
    %86 = arith.divf %84, %85 : vector<2x128xf32>
    %87 = vector.extract_strided_slice %74 {offsets = [0, 256], sizes = [2, 128], strides = [1, 1]} : vector<2x512xf32> to vector<2x128xf32>
    %88 = math.tanh %87 : vector<2x128xf32>
    %89 = vector.extract_strided_slice %74 {offsets = [0, 384], sizes = [2, 128], strides = [1, 1]} : vector<2x512xf32> to vector<2x128xf32>
    %90 = arith.negf %89 : vector<2x128xf32>
    %91 = math.exp %90 : vector<2x128xf32>
    %cst_23 = arith.constant 1.000000e+00 : f32
    %92 = vector.broadcast %cst_23 : f32 to vector<2x128xf32>
    %93 = arith.addf %92, %91 : vector<2x128xf32>
    %94 = arith.divf %92, %93 : vector<2x128xf32>
    %95 = arith.mulf %86, %69 : vector<2x128xf32>
    %96 = arith.mulf %80, %88 : vector<2x128xf32>
    %97 = arith.addf %95, %96 : vector<2x128xf32>
    %98 = math.tanh %97 : vector<2x128xf32>
    %99 = arith.mulf %94, %98 : vector<2x128xf32>
    %100 = vector.extract_strided_slice %12 {offsets = [6, 0], sizes = [2, 512], strides = [1, 1]} : vector<16x512xf32> to vector<2x512xf32>
    %cst_24 = arith.constant dense<0.000000e+00> : vector<2x512xf32>
    %101 = tpu.matmul %99, %13, %cst_24 {dimension_numbers = #tpu.dot_dimension_numbers<[1], [0], [0], [1], [0, 0, 1, 1], [], []>} : vector<2x128xf32>, vector<128x512xf32>, vector<2x512xf32> -> vector<2x512xf32>
    %102 = arith.addf %100, %101 : vector<2x512xf32>
    %103 = vector.extract_strided_slice %102 {offsets = [0, 0], sizes = [2, 128], strides = [1, 1]} : vector<2x512xf32> to vector<2x128xf32>
    %104 = arith.negf %103 : vector<2x128xf32>
    %105 = math.exp %104 : vector<2x128xf32>
    %cst_25 = arith.constant 1.000000e+00 : f32
    %106 = vector.broadcast %cst_25 : f32 to vector<2x128xf32>
    %107 = arith.addf %106, %105 : vector<2x128xf32>
    %108 = arith.divf %106, %107 : vector<2x128xf32>
    %109 = vector.extract_strided_slice %102 {offsets = [0, 128], sizes = [2, 128], strides = [1, 1]} : vector<2x512xf32> to vector<2x128xf32>
    %110 = arith.negf %109 : vector<2x128xf32>
    %111 = math.exp %110 : vector<2x128xf32>
    %cst_26 = arith.constant 1.000000e+00 : f32
    %112 = vector.broadcast %cst_26 : f32 to vector<2x128xf32>
    %113 = arith.addf %112, %111 : vector<2x128xf32>
    %114 = arith.divf %112, %113 : vector<2x128xf32>
    %115 = vector.extract_strided_slice %102 {offsets = [0, 256], sizes = [2, 128], strides = [1, 1]} : vector<2x512xf32> to vector<2x128xf32>
    %116 = math.tanh %115 : vector<2x128xf32>
    %117 = vector.extract_strided_slice %102 {offsets = [0, 384], sizes = [2, 128], strides = [1, 1]} : vector<2x512xf32> to vector<2x128xf32>
    %118 = arith.negf %117 : vector<2x128xf32>
    %119 = math.exp %118 : vector<2x128xf32>
    %cst_27 = arith.constant 1.000000e+00 : f32
    %120 = vector.broadcast %cst_27 : f32 to vector<2x128xf32>
    %121 = arith.addf %120, %119 : vector<2x128xf32>
    %122 = arith.divf %120, %121 : vector<2x128xf32>
    %123 = arith.mulf %114, %97 : vector<2x128xf32>
    %124 = arith.mulf %108, %116 : vector<2x128xf32>
    %125 = arith.addf %123, %124 : vector<2x128xf32>
    %126 = math.tanh %125 : vector<2x128xf32>
    %127 = arith.mulf %122, %126 : vector<2x128xf32>
    %128 = vector.extract_strided_slice %12 {offsets = [8, 0], sizes = [2, 512], strides = [1, 1]} : vector<16x512xf32> to vector<2x512xf32>
    %cst_28 = arith.constant dense<0.000000e+00> : vector<2x512xf32>
    %129 = tpu.matmul %127, %13, %cst_28 {dimension_numbers = #tpu.dot_dimension_numbers<[1], [0], [0], [1], [0, 0, 1, 1], [], []>} : vector<2x128xf32>, vector<128x512xf32>, vector<2x512xf32> -> vector<2x512xf32>
    %130 = arith.addf %128, %129 : vector<2x512xf32>
    %131 = vector.extract_strided_slice %130 {offsets = [0, 0], sizes = [2, 128], strides = [1, 1]} : vector<2x512xf32> to vector<2x128xf32>
    %132 = arith.negf %131 : vector<2x128xf32>
    %133 = math.exp %132 : vector<2x128xf32>
    %cst_29 = arith.constant 1.000000e+00 : f32
    %134 = vector.broadcast %cst_29 : f32 to vector<2x128xf32>
    %135 = arith.addf %134, %133 : vector<2x128xf32>
    %136 = arith.divf %134, %135 : vector<2x128xf32>
    %137 = vector.extract_strided_slice %130 {offsets = [0, 128], sizes = [2, 128], strides = [1, 1]} : vector<2x512xf32> to vector<2x128xf32>
    %138 = arith.negf %137 : vector<2x128xf32>
    %139 = math.exp %138 : vector<2x128xf32>
    %cst_30 = arith.constant 1.000000e+00 : f32
    %140 = vector.broadcast %cst_30 : f32 to vector<2x128xf32>
    %141 = arith.addf %140, %139 : vector<2x128xf32>
    %142 = arith.divf %140, %141 : vector<2x128xf32>
    %143 = vector.extract_strided_slice %130 {offsets = [0, 256], sizes = [2, 128], strides = [1, 1]} : vector<2x512xf32> to vector<2x128xf32>
    %144 = math.tanh %143 : vector<2x128xf32>
    %145 = vector.extract_strided_slice %130 {offsets = [0, 384], sizes = [2, 128], strides = [1, 1]} : vector<2x512xf32> to vector<2x128xf32>
    %146 = arith.negf %145 : vector<2x128xf32>
    %147 = math.exp %146 : vector<2x128xf32>
    %cst_31 = arith.constant 1.000000e+00 : f32
    %148 = vector.broadcast %cst_31 : f32 to vector<2x128xf32>
    %149 = arith.addf %148, %147 : vector<2x128xf32>
    %150 = arith.divf %148, %149 : vector<2x128xf32>
    %151 = arith.mulf %142, %125 : vector<2x128xf32>
    %152 = arith.mulf %136, %144 : vector<2x128xf32>
    %153 = arith.addf %151, %152 : vector<2x128xf32>
    %154 = math.tanh %153 : vector<2x128xf32>
    %155 = arith.mulf %150, %154 : vector<2x128xf32>
    %156 = vector.extract_strided_slice %12 {offsets = [10, 0], sizes = [2, 512], strides = [1, 1]} : vector<16x512xf32> to vector<2x512xf32>
    %cst_32 = arith.constant dense<0.000000e+00> : vector<2x512xf32>
    %157 = tpu.matmul %155, %13, %cst_32 {dimension_numbers = #tpu.dot_dimension_numbers<[1], [0], [0], [1], [0, 0, 1, 1], [], []>} : vector<2x128xf32>, vector<128x512xf32>, vector<2x512xf32> -> vector<2x512xf32>
    %158 = arith.addf %156, %157 : vector<2x512xf32>
    %159 = vector.extract_strided_slice %158 {offsets = [0, 0], sizes = [2, 128], strides = [1, 1]} : vector<2x512xf32> to vector<2x128xf32>
    %160 = arith.negf %159 : vector<2x128xf32>
    %161 = math.exp %160 : vector<2x128xf32>
    %cst_33 = arith.constant 1.000000e+00 : f32
    %162 = vector.broadcast %cst_33 : f32 to vector<2x128xf32>
    %163 = arith.addf %162, %161 : vector<2x128xf32>
    %164 = arith.divf %162, %163 : vector<2x128xf32>
    %165 = vector.extract_strided_slice %158 {offsets = [0, 128], sizes = [2, 128], strides = [1, 1]} : vector<2x512xf32> to vector<2x128xf32>
    %166 = arith.negf %165 : vector<2x128xf32>
    %167 = math.exp %166 : vector<2x128xf32>
    %cst_34 = arith.constant 1.000000e+00 : f32
    %168 = vector.broadcast %cst_34 : f32 to vector<2x128xf32>
    %169 = arith.addf %168, %167 : vector<2x128xf32>
    %170 = arith.divf %168, %169 : vector<2x128xf32>
    %171 = vector.extract_strided_slice %158 {offsets = [0, 256], sizes = [2, 128], strides = [1, 1]} : vector<2x512xf32> to vector<2x128xf32>
    %172 = math.tanh %171 : vector<2x128xf32>
    %173 = vector.extract_strided_slice %158 {offsets = [0, 384], sizes = [2, 128], strides = [1, 1]} : vector<2x512xf32> to vector<2x128xf32>
    %174 = arith.negf %173 : vector<2x128xf32>
    %175 = math.exp %174 : vector<2x128xf32>
    %cst_35 = arith.constant 1.000000e+00 : f32
    %176 = vector.broadcast %cst_35 : f32 to vector<2x128xf32>
    %177 = arith.addf %176, %175 : vector<2x128xf32>
    %178 = arith.divf %176, %177 : vector<2x128xf32>
    %179 = arith.mulf %170, %153 : vector<2x128xf32>
    %180 = arith.mulf %164, %172 : vector<2x128xf32>
    %181 = arith.addf %179, %180 : vector<2x128xf32>
    %182 = math.tanh %181 : vector<2x128xf32>
    %183 = arith.mulf %178, %182 : vector<2x128xf32>
    %184 = vector.extract_strided_slice %12 {offsets = [12, 0], sizes = [2, 512], strides = [1, 1]} : vector<16x512xf32> to vector<2x512xf32>
    %cst_36 = arith.constant dense<0.000000e+00> : vector<2x512xf32>
    %185 = tpu.matmul %183, %13, %cst_36 {dimension_numbers = #tpu.dot_dimension_numbers<[1], [0], [0], [1], [0, 0, 1, 1], [], []>} : vector<2x128xf32>, vector<128x512xf32>, vector<2x512xf32> -> vector<2x512xf32>
    %186 = arith.addf %184, %185 : vector<2x512xf32>
    %187 = vector.extract_strided_slice %186 {offsets = [0, 0], sizes = [2, 128], strides = [1, 1]} : vector<2x512xf32> to vector<2x128xf32>
    %188 = arith.negf %187 : vector<2x128xf32>
    %189 = math.exp %188 : vector<2x128xf32>
    %cst_37 = arith.constant 1.000000e+00 : f32
    %190 = vector.broadcast %cst_37 : f32 to vector<2x128xf32>
    %191 = arith.addf %190, %189 : vector<2x128xf32>
    %192 = arith.divf %190, %191 : vector<2x128xf32>
    %193 = vector.extract_strided_slice %186 {offsets = [0, 128], sizes = [2, 128], strides = [1, 1]} : vector<2x512xf32> to vector<2x128xf32>
    %194 = arith.negf %193 : vector<2x128xf32>
    %195 = math.exp %194 : vector<2x128xf32>
    %cst_38 = arith.constant 1.000000e+00 : f32
    %196 = vector.broadcast %cst_38 : f32 to vector<2x128xf32>
    %197 = arith.addf %196, %195 : vector<2x128xf32>
    %198 = arith.divf %196, %197 : vector<2x128xf32>
    %199 = vector.extract_strided_slice %186 {offsets = [0, 256], sizes = [2, 128], strides = [1, 1]} : vector<2x512xf32> to vector<2x128xf32>
    %200 = math.tanh %199 : vector<2x128xf32>
    %201 = vector.extract_strided_slice %186 {offsets = [0, 384], sizes = [2, 128], strides = [1, 1]} : vector<2x512xf32> to vector<2x128xf32>
    %202 = arith.negf %201 : vector<2x128xf32>
    %203 = math.exp %202 : vector<2x128xf32>
    %cst_39 = arith.constant 1.000000e+00 : f32
    %204 = vector.broadcast %cst_39 : f32 to vector<2x128xf32>
    %205 = arith.addf %204, %203 : vector<2x128xf32>
    %206 = arith.divf %204, %205 : vector<2x128xf32>
    %207 = arith.mulf %198, %181 : vector<2x128xf32>
    %208 = arith.mulf %192, %200 : vector<2x128xf32>
    %209 = arith.addf %207, %208 : vector<2x128xf32>
    %210 = math.tanh %209 : vector<2x128xf32>
    %211 = arith.mulf %206, %210 : vector<2x128xf32>
    %212 = vector.extract_strided_slice %12 {offsets = [14, 0], sizes = [2, 512], strides = [1, 1]} : vector<16x512xf32> to vector<2x512xf32>
    %cst_40 = arith.constant dense<0.000000e+00> : vector<2x512xf32>
    %213 = tpu.matmul %211, %13, %cst_40 {dimension_numbers = #tpu.dot_dimension_numbers<[1], [0], [0], [1], [0, 0, 1, 1], [], []>} : vector<2x128xf32>, vector<128x512xf32>, vector<2x512xf32> -> vector<2x512xf32>
    %214 = arith.addf %212, %213 : vector<2x512xf32>
    %215 = vector.extract_strided_slice %214 {offsets = [0, 0], sizes = [2, 128], strides = [1, 1]} : vector<2x512xf32> to vector<2x128xf32>
    %216 = arith.negf %215 : vector<2x128xf32>
    %217 = math.exp %216 : vector<2x128xf32>
    %cst_41 = arith.constant 1.000000e+00 : f32
    %218 = vector.broadcast %cst_41 : f32 to vector<2x128xf32>
    %219 = arith.addf %218, %217 : vector<2x128xf32>
    %220 = arith.divf %218, %219 : vector<2x128xf32>
    %221 = vector.extract_strided_slice %214 {offsets = [0, 128], sizes = [2, 128], strides = [1, 1]} : vector<2x512xf32> to vector<2x128xf32>
    %222 = arith.negf %221 : vector<2x128xf32>
    %223 = math.exp %222 : vector<2x128xf32>
    %cst_42 = arith.constant 1.000000e+00 : f32
    %224 = vector.broadcast %cst_42 : f32 to vector<2x128xf32>
    %225 = arith.addf %224, %223 : vector<2x128xf32>
    %226 = arith.divf %224, %225 : vector<2x128xf32>
    %227 = vector.extract_strided_slice %214 {offsets = [0, 256], sizes = [2, 128], strides = [1, 1]} : vector<2x512xf32> to vector<2x128xf32>
    %228 = math.tanh %227 : vector<2x128xf32>
    %229 = vector.extract_strided_slice %214 {offsets = [0, 384], sizes = [2, 128], strides = [1, 1]} : vector<2x512xf32> to vector<2x128xf32>
    %230 = arith.negf %229 : vector<2x128xf32>
    %231 = math.exp %230 : vector<2x128xf32>
    %cst_43 = arith.constant 1.000000e+00 : f32
    %232 = vector.broadcast %cst_43 : f32 to vector<2x128xf32>
    %233 = arith.addf %232, %231 : vector<2x128xf32>
    %234 = arith.divf %232, %233 : vector<2x128xf32>
    %235 = arith.mulf %226, %209 : vector<2x128xf32>
    %236 = arith.mulf %220, %228 : vector<2x128xf32>
    %237 = arith.addf %235, %236 : vector<2x128xf32>
    %238 = math.tanh %237 : vector<2x128xf32>
    %239 = arith.mulf %234, %238 : vector<2x128xf32>
    %240 = vector.extract_strided_slice %239 {offsets = [0, 0], sizes = [2, 33], strides = [1, 1]} : vector<2x128xf32> to vector<2x33xf32>
    %c0_44 = arith.constant 0 : index
    %c0_45 = arith.constant 0 : index
    %241 = vector.load %arg5[%c0_44, %c0_45] : memref<2x33xf32, #tpu.memory_space<vmem>>, vector<2x33xf32>
    tpu.vector_store %arg5[%c0_44, %c0_45], %240 {strides = array<i32>} : memref<2x33xf32, #tpu.memory_space<vmem>>, vector<2x33xf32>,
    return
  }
}

</mosaic_0001>

<llo_original>
// kernel: sentence_encoder_forward.1
$region0: #{sentence_encoder_forward.1}
  #allocation0 [shape = 'u32[]', space=smem, size = 0x4, offset = 0x4, fixed_abs, tag = 'smem constant byte address 0x4 - core index']
  #allocation1 [shape = 'u32[144,128]{1,0:T(1,128)}', space=vmem, size = 0x12000, scoped, tag = 'internal scratch']
  %s0 = inlined_call_operand.vmem [shape: s32[16,1], index: 0, kind: input, shape index: {}]
  %s1 = inlined_call_operand.hbm [shape: f32[128,128], index: 1, kind: input, shape index: {}]
  %s2 = inlined_call_operand.hbm [shape: f32[128,512], index: 2, kind: input, shape index: {}]
  %s3 = inlined_call_operand.hbm [shape: f32[128,512], index: 3, kind: input, shape index: {}]
  %s4 = inlined_call_operand.vmem [shape: f32[1,512], index: 4, kind: input, shape index: {}]
  %s5 = inlined_call_operand.hbm [shape: f32[2,33], index: 5, kind: output, shape index: {}]
  %s6 = sld [smem:[#allocation0]]
  $region42: #{sentence_encoder_forward.1} parent=0
    _
  %s8 = ssub.s32 1, %s6
  %s9 = scalar_select 0, %s8, %s6
  $region1: #{sentence_encoder_forward.1} parent=0
    #allocation2 [shape = 'u8[65536]{0}', space=vmem, size = 0x10000, scoped, tag = 'input window, operand 1, single buffered']
    #allocation3 [shape = 's32[1]{0}', space=sflag, size = 0x4, scoped, tag = 'scoped memory for sentence_encoder_forward.1']
    #allocation4 [shape = 's32[1]{0}', space=sflag, size = 0x4, scoped, tag = 'scoped memory for sentence_encoder_forward.1']
    #allocation5 [shape = 'u8[262144]{0}', space=vmem, size = 0x40000, scoped, tag = 'input window, operand 2, single buffered']
    #allocation6 [shape = 's32[1]{0}', space=sflag, size = 0x4, scoped, tag = 'scoped memory for sentence_encoder_forward.1']
    #allocation7 [shape = 'u8[262144]{0}', space=vmem, size = 0x40000, scoped, tag = 'input window, operand 3, single buffered']
    #allocation8 [shape = 'u8[1024]{0}', space=vmem, size = 0x400, scoped, tag = 'output window, operand 0, single buffered']
    %10 = vsyncpa [#allocation3], 0
    %11 = vsyncpa [#allocation6], 0
    %12 = vsyncpa [#allocation4], 0
    // Predicated region
    $region2: #{sentence_encoder_forward.1} parent=1 // pred_check
      _
    $region3: #{sentence_encoder_forward.1} parent=1 // pred_check_branch
      %14 = sbr.rel (0) target = $region5
    $region4: #{sentence_encoder_forward.1} parent=1 // pred_region
      _
    $region5: #{sentence_encoder_forward.1} parent=1 // pred_fallthru
      _
    // Predicated region
    $region6: #{sentence_encoder_forward.1} parent=1 // pred_check
      _
    $region7: #{sentence_encoder_forward.1} parent=1 // pred_check_branch
      %16 = sbr.rel (0) target = $region9
    $region8: #{sentence_encoder_forward.1} parent=1 // pred_region
      %s18 = ssub.s32 2048, 2048
      %19 = vsyncadd [#allocation3], %s18
      %s20 = sshll.u32 [#allocation2], 4
      %s21 = int_to_ptr.vmem [resolvable:$true] %s20
      %26 = dma.hbm_to_vmem [thread:$0]  %s1, 2048, %s21, [#allocation3], 128, 128, 8
    $region9: #{sentence_encoder_forward.1} parent=1 // pred_fallthru
      _
    // Predicated region
    $region10: #{sentence_encoder_forward.1} parent=1 // pred_check
      _
    $region11: #{sentence_encoder_forward.1} parent=1 // pred_check_branch
      %28 = sbr.rel (0) target = $region13
    $region12: #{sentence_encoder_forward.1} parent=1 // pred_region
      %s30 = ssub.s32 8192, 8192
      %31 = vsyncadd [#allocation6], %s30
      %s32 = sshll.u32 [#allocation5], 4
      %s33 = int_to_ptr.vmem [resolvable:$true] %s32
      %38 = dma.hbm_to_vmem [thread:$0]  %s2, 8192, %s33, [#allocation6], 512, 512, 32
    $region13: #{sentence_encoder_forward.1} parent=1 // pred_fallthru
      _
    // Predicated region
    $region14: #{sentence_encoder_forward.1} parent=1 // pred_check
      _
    $region15: #{sentence_encoder_forward.1} parent=1 // pred_check_branch
      %40 = sbr.rel (0) target = $region17
    $region16: #{sentence_encoder_forward.1} parent=1 // pred_region
      %s42 = ssub.s32 8192, 8192
      %43 = vsyncadd [#allocation6], %s42
      %s44 = sshll.u32 [#allocation7], 4
      %s45 = int_to_ptr.vmem [resolvable:$true] %s44
      %50 = dma.hbm_to_vmem [thread:$0]  %s3, 8192, %s45, [#allocation6], 512, 512, 32
    $region17: #{sentence_encoder_forward.1} parent=1 // pred_fallthru
      _
    // Predicated region
    $region18: #{sentence_encoder_forward.1} parent=1 // pred_check
      _
    $region19: #{sentence_encoder_forward.1} parent=1 // pred_check_branch
      %52 = sbr.rel (0) target = $region21
    $region20: #{sentence_encoder_forward.1} parent=1 // pred_region
      _
    $region21: #{sentence_encoder_forward.1} parent=1 // pred_fallthru
      _
    // Predicated region
    $region22: #{sentence_encoder_forward.1} parent=1 // pred_check
      _
    $region23: #{sentence_encoder_forward.1} parent=1 // pred_check_branch
      %54 = sbr.rel (0) target = $region25
    $region24: #{sentence_encoder_forward.1} parent=1 // pred_region
      %55 = dma.done [#allocation3], 2048
    $region25: #{sentence_encoder_forward.1} parent=1 // pred_fallthru
      _
    // Predicated region
    $region26: #{sentence_encoder_forward.1} parent=1 // pred_check
      _
    $region27: #{sentence_encoder_forward.1} parent=1 // pred_check_branch
      %57 = sbr.rel (0) target = $region29
    $region28: #{sentence_encoder_forward.1} parent=1 // pred_region
      %58 = dma.done [#allocation6], 8192
    $region29: #{sentence_encoder_forward.1} parent=1 // pred_fallthru
      _
    // Predicated region
    $region30: #{sentence_encoder_forward.1} parent=1 // pred_check
      _
    $region31: #{sentence_encoder_forward.1} parent=1 // pred_check_branch
      %60 = sbr.rel (0) target = $region33
    $region32: #{sentence_encoder_forward.1} parent=1 // pred_region
      %61 = dma.done [#allocation6], 8192
    $region33: #{sentence_encoder_forward.1} parent=1 // pred_fallthru
      _
    %v62 = vld [vmem:[%s0] sm:$0xff]
    %v63 = vld [vmem:[%s0 + $0x8] sm:$0xff]
    %v64 = vlaneseq
    %v65 = vand.u32 %v64, 127
    %66 = vset.pattern.permute.xlu0 0
    %67 = vperm.xlu0 %66, %v62
    %v68 = vpop.permute.xlu0 %67
    %69 = vset.pattern.permute.xlu0 0
    %70 = vperm.xlu0 %69, %v63
    %v71 = vpop.permute.xlu0 %70
    %vm72 = vcmp.eq.s32.totalorder %v68, %v65
    %vm73 = vcmp.eq.s32.totalorder %v71, %v65
    %v74 = vsel %vm72, 1, 0
    %v75 = vsel %vm73, 1, 0
    %v76 = vcvt.s32.f32 %v74
    %v77 = vcvt.s32.f32 %v75
    %v78 = vld [vmem:[#allocation2] sm:$0xff]
    %v79 = vld [vmem:[#allocation2 + $0x8] sm:$0xff]
    %v80 = vld [vmem:[#allocation2 + $0x10] sm:$0xff]
    %v81 = vld [vmem:[#allocation2 + $0x18] sm:$0xff]
    %v82 = vld [vmem:[#allocation2 + $0x20] sm:$0xff]
    %v83 = vld [vmem:[#allocation2 + $0x28] sm:$0xff]
    %v84 = vld [vmem:[#allocation2 + $0x30] sm:$0xff]
    %v85 = vld [vmem:[#allocation2 + $0x38] sm:$0xff]
    %v86 = vld [vmem:[#allocation2 + $0x40] sm:$0xff]
    %v87 = vld [vmem:[#allocation2 + $0x48] sm:$0xff]
    %v88 = vld [vmem:[#allocation2 + $0x50] sm:$0xff]
    %v89 = vld [vmem:[#allocation2 + $0x58] sm:$0xff]
    %v90 = vld [vmem:[#allocation2 + $0x60] sm:$0xff]
    %v91 = vld [vmem:[#allocation2 + $0x68] sm:$0xff]
    %v92 = vld [vmem:[#allocation2 + $0x70] sm:$0xff]
    %v93 = vld [vmem:[#allocation2 + $0x78] sm:$0xff]
    %94 = vmatprep.subr.mxu0 0.0
    %95 = vmatpush1.msra.mxu0 %v78
    %96 = vmatprep.subr.mxu0 0.0
    %97 = vmatpush1.msra.mxu0 %v79
    %98 = vmatprep.subr.mxu0 0.0
    %99 = vmatpush1.msra.mxu0 %v80
    %100 = vmatprep.subr.mxu0 0.0
    %101 = vmatpush1.msra.mxu0 %v81
    %102 = vmatprep.subr.mxu0 0.0
    %103 = vmatpush1.msra.mxu0 %v82
    %104 = vmatprep.subr.mxu0 0.0
    %105 = vmatpush1.msra.mxu0 %v83
    %106 = vmatprep.subr.mxu0 0.0
    %107 = vmatpush1.msra.mxu0 %v84
    %108 = vmatprep.subr.mxu0 0.0
    %109 = vmatpush1.msra.mxu0 %v85
    %110 = vmatprep.subr.mxu0 0.0
    %111 = vmatpush1.msra.mxu0 %v86
    %112 = vmatprep.subr.mxu0 0.0
    %113 = vmatpush1.msra.mxu0 %v87
    %114 = vmatprep.subr.mxu0 0.0
    %115 = vmatpush1.msra.mxu0 %v88
    %116 = vmatprep.subr.mxu0 0.0
    %117 = vmatpush1.msra.mxu0 %v89
    %118 = vmatprep.subr.mxu0 0.0
    %119 = vmatpush1.msra.mxu0 %v90
    %120 = vmatprep.subr.mxu0 0.0
    %121 = vmatpush1.msra.mxu0 %v91
    %122 = vmatprep.subr.mxu0 0.0
    %123 = vmatpush1.msra.mxu0 %v92
    %124 = vmatprep.subr.mxu0 0.0
    %125 = vmatpush1.msra.mxu0 %v93
    %126 = vmatprep.subr.mxu0 0.0
    %127 = vmatpush1.msra.mxu0 0.0
    %128 = vmatprep.subr.mxu0 0.0
    %129 = vmatpush1.msra.mxu0 0.0
    %130 = vmatprep.subr.mxu0 0.0
    %131 = vmatpush1.msra.mxu0 0.0
    %132 = vmatprep.subr.mxu0 0.0
    %133 = vmatpush1.msra.mxu0 0.0
    %134 = vmatprep.subr.mxu0 0.0
    %135 = vmatpush1.msra.mxu0 0.0
    %136 = vmatprep.subr.mxu0 0.0
    %137 = vmatpush1.msra.mxu0 0.0
    %138 = vmatprep.subr.mxu0 0.0
    %139 = vmatpush1.msra.mxu0 0.0
    %140 = vmatprep.subr.mxu0 0.0
    %141 = vmatpush1.msra.mxu0 0.0
    %142 = vmatprep.subr.mxu0 0.0
    %143 = vmatpush1.msra.mxu0 0.0
    %144 = vmatprep.subr.mxu0 0.0
    %145 = vmatpush1.msra.mxu0 0.0
    %146 = vmatprep.subr.mxu0 0.0
    %147 = vmatpush1.msra.mxu0 0.0
    %148 = vmatprep.subr.mxu0 0.0
    %149 = vmatpush1.msra.mxu0 0.0
    %150 = vmatprep.subr.mxu0 0.0
    %151 = vmatpush1.msra.mxu0 0.0
    %152 = vmatprep.subr.mxu0 0.0
    %153 = vmatpush1.msra.mxu0 0.0
    %154 = vmatprep.subr.mxu0 0.0
    %155 = vmatpush1.msra.mxu0 0.0
    %156 = vmatprep.subr.mxu0 0.0
    %157 = vmatpush1.msra.mxu0 0.0
    %158 = vmatprep.mubr.f32.mxu0 0.0
    %159 = vmatmul.mubr.f32.gmra.mrb[0].mxu0 %v76
    %v160 = vpop.f32.mrb[0].mxu0
    %v161 = vadd.f32 0.0, %v160
    %v162 = vpop.f32.mrb[0].mxu0
    %163 = vmatprep.mubr.f32.mxu0 0.0
    %164 = vmatmul.mubr.f32.gmra.mrb[0].mxu0 %v77
    %v165 = vpop.f32.mrb[0].mxu0
    %v166 = vadd.f32 0.0, %v165
    %v167 = vpop.f32.mrb[0].mxu0
    %168 = vdwg.mxu0
    %v169 = vld [vmem:[#allocation5] sm:$0xff]
    %v170 = vld [vmem:[#allocation5 + $0x8] sm:$0xff]
    %v171 = vld [vmem:[#allocation5 + $0x10] sm:$0xff]
    %v172 = vld [vmem:[#allocation5 + $0x18] sm:$0xff]
    %v173 = vld [vmem:[#allocation5 + $0x20] sm:$0xff]
    %v174 = vld [vmem:[#allocation5 + $0x28] sm:$0xff]
    %v175 = vld [vmem:[#allocation5 + $0x30] sm:$0xff]
    %v176 = vld [vmem:[#allocation5 + $0x38] sm:$0xff]
    %v177 = vld [vmem:[#allocation5 + $0x40] sm:$0xff]
    %v178 = vld [vmem:[#allocation5 + $0x48] sm:$0xff]
    %v179 = vld [vmem:[#allocation5 + $0x50] sm:$0xff]
    %v180 = vld [vmem:[#allocation5 + $0x58] sm:$0xff]
    %v181 = vld [vmem:[#allocation5 + $0x60] sm:$0xff]
    %v182 = vld [vmem:[#allocation5 + $0x68] sm:$0xff]
    %v183 = vld [vmem:[#allocation5 + $0x70] sm:$0xff]
    %v184 = vld [vmem:[#allocation5 + $0x78] sm:$0xff]
    %v185 = vld [vmem:[#allocation5 + $0x80] sm:$0xff]
    %v186 = vld [vmem:[#allocation5 + $0x88] sm:$0xff]
    %v187 = vld [vmem:[#allocation5 + $0x90] sm:$0xff]
    %v188 = vld [vmem:[#allocation5 + $0x98] sm:$0xff]
    %v189 = vld [vmem:[#allocation5 + $0xa0] sm:$0xff]
    %v190 = vld [vmem:[#allocation5 + $0xa8] sm:$0xff]
    %v191 = vld [vmem:[#allocation5 + $0xb0] sm:$0xff]
    %v192 = vld [vmem:[#allocation5 + $0xb8] sm:$0xff]
    %v193 = vld [vmem:[#allocation5 + $0xc0] sm:$0xff]
    %v194 = vld [vmem:[#allocation5 + $0xc8] sm:$0xff]
    %v195 = vld [vmem:[#allocation5 + $0xd0] sm:$0xff]
    %v196 = vld [vmem:[#allocation5 + $0xd8] sm:$0xff]
    %v197 = vld [vmem:[#allocation5 + $0xe0] sm:$0xff]
    %v198 = vld [vmem:[#allocation5 + $0xe8] sm:$0xff]
    %v199 = vld [vmem:[#allocation5 + $0xf0] sm:$0xff]
    %v200 = vld [vmem:[#allocation5 + $0xf8] sm:$0xff]
    %v201 = vld [vmem:[#allocation5 + $0x100] sm:$0xff]
    %v202 = vld [vmem:[#allocation5 + $0x108] sm:$0xff]
    %v203 = vld [vmem:[#allocation5 + $0x110] sm:$0xff]
    %v204 = vld [vmem:[#allocation5 + $0x118] sm:$0xff]
    %v205 = vld [vmem:[#allocation5 + $0x120] sm:$0xff]
    %v206 = vld [vmem:[#allocation5 + $0x128] sm:$0xff]
    %v207 = vld [vmem:[#allocation5 + $0x130] sm:$0xff]
    %v208 = vld [vmem:[#allocation5 + $0x138] sm:$0xff]
    %v209 = vld [vmem:[#allocation5 + $0x140] sm:$0xff]
    %v210 = vld [vmem:[#allocation5 + $0x148] sm:$0xff]
    %v211 = vld [vmem:[#allocation5 + $0x150] sm:$0xff]
    %v212 = vld [vmem:[#allocation5 + $0x158] sm:$0xff]
    %v213 = vld [vmem:[#allocation5 + $0x160] sm:$0xff]
    %v214 = vld [vmem:[#allocation5 + $0x168] sm:$0xff]
    %v215 = vld [vmem:[#allocation5 + $0x170] sm:$0xff]
    %v216 = vld [vmem:[#allocation5 + $0x178] sm:$0xff]
    %v217 = vld [vmem:[#allocation5 + $0x180] sm:$0xff]
    %v218 = vld [vmem:[#allocation5 + $0x188] sm:$0xff]
    %v219 = vld [vmem:[#allocation5 + $0x190] sm:$0xff]
    %v220 = vld [vmem:[#allocation5 + $0x198] sm:$0xff]
    %v221 = vld [vmem:[#allocation5 + $0x1a0] sm:$0xff]
    %v222 = vld [vmem:[#allocation5 + $0x1a8] sm:$0xff]
    %v223 = vld [vmem:[#allocation5 + $0x1b0] sm:$0xff]
    %v224 = vld [vmem:[#allocation5 + $0x1b8] sm:$0xff]
    %v225 = vld [vmem:[#allocation5 + $0x1c0] sm:$0xff]
    %v226 = vld [vmem:[#allocation5 + $0x1c8] sm:$0xff]
    %v227 = vld [vmem:[#allocation5 + $0x1d0] sm:$0xff]
    %v228 = vld [vmem:[#allocation5 + $0x1d8] sm:$0xff]
    %v229 = vld [vmem:[#allocation5 + $0x1e0] sm:$0xff]
    %v230 = vld [vmem:[#allocation5 + $0x1e8] sm:$0xff]
    %v231 = vld [vmem:[#allocation5 + $0x1f0] sm:$0xff]
    %v232 = vld [vmem:[#allocation5 + $0x1f8] sm:$0xff]
    %v233 = vld [vmem:[%s4] sm:$0xf]
    %v235 = vlaneseq
    %v236 = vshrl.u32 %v235, 7
    %v237 = vsub.s32 0, %v236
    %v238 = vrot.slane %v233, %v237
    %v239 = vlaneseq
    %v240 = vshrl.u32 %v239, 7
    %v241 = vsub.s32 1, %v240
    %v242 = vrot.slane %v233, %v241
    %v243 = vlaneseq
    %v244 = vshrl.u32 %v243, 7
    %v245 = vsub.s32 2, %v244
    %v246 = vrot.slane %v233, %v245
    %v247 = vlaneseq
    %v248 = vshrl.u32 %v247, 7
    %v249 = vsub.s32 3, %v248
    %v250 = vrot.slane %v233, %v249
    %255 = vmatprep.subr.mxu0 %v170
    %256 = vmatpush1.msra.mxu0 %v169
    %257 = vmatprep.subr.mxu0 %v174
    %258 = vmatpush1.msra.mxu0 %v173
    %259 = vmatprep.subr.mxu0 %v178
    %260 = vmatpush1.msra.mxu0 %v177
    %261 = vmatprep.subr.mxu0 %v182
    %262 = vmatpush1.msra.mxu0 %v181
    %263 = vmatprep.subr.mxu0 %v186
    %264 = vmatpush1.msra.mxu0 %v185
    %265 = vmatprep.subr.mxu0 %v190
    %266 = vmatpush1.msra.mxu0 %v189
    %267 = vmatprep.subr.mxu0 %v194
    %268 = vmatpush1.msra.mxu0 %v193
    %269 = vmatprep.subr.mxu0 %v198
    %270 = vmatpush1.msra.mxu0 %v197
    %271 = vmatprep.subr.mxu0 %v202
    %272 = vmatpush1.msra.mxu0 %v201
    %273 = vmatprep.subr.mxu0 %v206
    %274 = vmatpush1.msra.mxu0 %v205
    %275 = vmatprep.subr.mxu0 %v210
    %276 = vmatpush1.msra.mxu0 %v209
    %277 = vmatprep.subr.mxu0 %v214
    %278 = vmatpush1.msra.mxu0 %v213
    %279 = vmatprep.subr.mxu0 %v218
    %280 = vmatpush1.msra.mxu0 %v217
    %281 = vmatprep.subr.mxu0 %v222
    %282 = vmatpush1.msra.mxu0 %v221
    %283 = vmatprep.subr.mxu0 %v226
    %284 = vmatpush1.msra.mxu0 %v225
    %285 = vmatprep.subr.mxu0 %v230
    %286 = vmatpush1.msra.mxu0 %v229
    %287 = vmatprep.subr.mxu0 0.0
    %288 = vmatpush1.msra.mxu0 0.0
    %289 = vmatprep.subr.mxu0 0.0
    %290 = vmatpush1.msra.mxu0 0.0
    %291 = vmatprep.subr.mxu0 0.0
    %292 = vmatpush1.msra.mxu0 0.0
    %293 = vmatprep.subr.mxu0 0.0
    %294 = vmatpush1.msra.mxu0 0.0
    %295 = vmatprep.subr.mxu0 0.0
    %296 = vmatpush1.msra.mxu0 0.0
    %297 = vmatprep.subr.mxu0 0.0
    %298 = vmatpush1.msra.mxu0 0.0
    %299 = vmatprep.subr.mxu0 0.0
    %300 = vmatpush1.msra.mxu0 0.0
    %301 = vmatprep.subr.mxu0 0.0
    %302 = vmatpush1.msra.mxu0 0.0
    %303 = vmatprep.subr.mxu0 0.0
    %304 = vmatpush1.msra.mxu0 0.0
    %305 = vmatprep.subr.mxu0 0.0
    %306 = vmatpush1.msra.mxu0 0.0
    %307 = vmatprep.subr.mxu0 0.0
    %308 = vmatpush1.msra.mxu0 0.0
    %309 = vmatprep.subr.mxu0 0.0
    %310 = vmatpush1.msra.mxu0 0.0
    %311 = vmatprep.subr.mxu0 0.0
    %312 = vmatpush1.msra.mxu0 0.0
    %313 = vmatprep.subr.mxu0 0.0
    %314 = vmatpush1.msra.mxu0 0.0
    %315 = vmatprep.subr.mxu0 0.0
    %316 = vmatpush1.msra.mxu0 0.0
    %317 = vmatprep.subr.mxu0 0.0
    %318 = vmatpush1.msra.mxu0 0.0
    %319 = vmatprep.mubr.f32.mxu0 0.0
    %320 = vmatmul.mubr.f32.gmra.mrb[0].mxu0 %v161
    %v321 = vpop.f32.mrb[0].mxu0
    %v322 = vadd.f32 %v238, %v321
    %v323 = vpop.f32.mrb[0].mxu0
    %v324 = vadd.f32 %v242, %v323
    %325 = vmatprep.mubr.f32.mxu0 0.0
    %326 = vmatmul.mubr.f32.gmra.mrb[0].mxu0 %v166
    %v327 = vpop.f32.mrb[0].mxu0
    %v328 = vadd.f32 %v238, %v327
    %v329 = vpop.f32.mrb[0].mxu0
    %v330 = vadd.f32 %v242, %v329
    %331 = vdwg.mxu0
    %332 = vmatprep.subr.mxu0 %v172
    %333 = vmatpush1.msra.mxu0 %v171
    %334 = vmatprep.subr.mxu0 %v176
    %335 = vmatpush1.msra.mxu0 %v175
    %336 = vmatprep.subr.mxu0 %v180
    %337 = vmatpush1.msra.mxu0 %v179
    %338 = vmatprep.subr.mxu0 %v184
    %339 = vmatpush1.msra.mxu0 %v183
    %340 = vmatprep.subr.mxu0 %v188
    %341 = vmatpush1.msra.mxu0 %v187
    %342 = vmatprep.subr.mxu0 %v192
    %343 = vmatpush1.msra.mxu0 %v191
    %344 = vmatprep.subr.mxu0 %v196
    %345 = vmatpush1.msra.mxu0 %v195
    %346 = vmatprep.subr.mxu0 %v200
    %347 = vmatpush1.msra.mxu0 %v199
    %348 = vmatprep.subr.mxu0 %v204
    %349 = vmatpush1.msra.mxu0 %v203
    %350 = vmatprep.subr.mxu0 %v208
    %351 = vmatpush1.msra.mxu0 %v207
    %352 = vmatprep.subr.mxu0 %v212
    %353 = vmatpush1.msra.mxu0 %v211
    %354 = vmatprep.subr.mxu0 %v216
    %355 = vmatpush1.msra.mxu0 %v215
    %356 = vmatprep.subr.mxu0 %v220
    %357 = vmatpush1.msra.mxu0 %v219
    %358 = vmatprep.subr.mxu0 %v224
    %359 = vmatpush1.msra.mxu0 %v223
    %360 = vmatprep.subr.mxu0 %v228
    %361 = vmatpush1.msra.mxu0 %v227
    %362 = vmatprep.subr.mxu0 %v232
    %363 = vmatpush1.msra.mxu0 %v231
    %364 = vmatprep.subr.mxu0 0.0
    %365 = vmatpush1.msra.mxu0 0.0
    %366 = vmatprep.subr.mxu0 0.0
    %367 = vmatpush1.msra.mxu0 0.0
    %368 = vmatprep.subr.mxu0 0.0
    %369 = vmatpush1.msra.mxu0 0.0
    %370 = vmatprep.subr.mxu0 0.0
    %371 = vmatpush1.msra.mxu0 0.0
    %372 = vmatprep.subr.mxu0 0.0
    %373 = vmatpush1.msra.mxu0 0.0
    %374 = vmatprep.subr.mxu0 0.0
    %375 = vmatpush1.msra.mxu0 0.0
    %376 = vmatprep.subr.mxu0 0.0
    %377 = vmatpush1.msra.mxu0 0.0
    %378 = vmatprep.subr.mxu0 0.0
    %379 = vmatpush1.msra.mxu0 0.0
    %380 = vmatprep.subr.mxu0 0.0
    %381 = vmatpush1.msra.mxu0 0.0
    %382 = vmatprep.subr.mxu0 0.0
    %383 = vmatpush1.msra.mxu0 0.0
    %384 = vmatprep.subr.mxu0 0.0
    %385 = vmatpush1.msra.mxu0 0.0
    %386 = vmatprep.subr.mxu0 0.0
    %387 = vmatpush1.msra.mxu0 0.0
    %388 = vmatprep.subr.mxu0 0.0
    %389 = vmatpush1.msra.mxu0 0.0
    %390 = vmatprep.subr.mxu0 0.0
    %391 = vmatpush1.msra.mxu0 0.0
    %392 = vmatprep.subr.mxu0 0.0
    %393 = vmatpush1.msra.mxu0 0.0
    %394 = vmatprep.subr.mxu0 0.0
    %395 = vmatpush1.msra.mxu0 0.0
    %396 = vmatprep.mubr.f32.mxu0 0.0
    %397 = vmatmul.mubr.f32.gmra.mrb[0].mxu0 %v161
    %v398 = vpop.f32.mrb[0].mxu0
    %v399 = vadd.f32 %v246, %v398
    %v400 = vpop.f32.mrb[0].mxu0
    %v401 = vadd.f32 %v250, %v400
    %402 = vmatprep.mubr.f32.mxu0 0.0
    %403 = vmatmul.mubr.f32.gmra.mrb[0].mxu0 %v166
    %v404 = vpop.f32.mrb[0].mxu0
    %v405 = vadd.f32 %v246, %v404
    %v406 = vpop.f32.mrb[0].mxu0
    %v407 = vadd.f32 %v250, %v406
    %408 = vdwg.mxu0
    %v409 = vld [vmem:[#allocation7] sm:$0xff]
    %v410 = vld [vmem:[#allocation7 + $0x8] sm:$0xff]
    %v411 = vld [vmem:[#allocation7 + $0x10] sm:$0xff]
    %v412 = vld [vmem:[#allocation7 + $0x18] sm:$0xff]
    %v413 = vld [vmem:[#allocation7 + $0x20] sm:$0xff]
    %v414 = vld [vmem:[#allocation7 + $0x28] sm:$0xff]
    %v415 = vld [vmem:[#allocation7 + $0x30] sm:$0xff]
    %v416 = vld [vmem:[#allocation7 + $0x38] sm:$0xff]
    %v417 = vld [vmem:[#allocation7 + $0x40] sm:$0xff]
    %v418 = vld [vmem:[#allocation7 + $0x48] sm:$0xff]
    %v419 = vld [vmem:[#allocation7 + $0x50] sm:$0xff]
    %v420 = vld [vmem:[#allocation7 + $0x58] sm:$0xff]
    %v421 = vld [vmem:[#allocation7 + $0x60] sm:$0xff]
    %v422 = vld [vmem:[#allocation7 + $0x68] sm:$0xff]
    %v423 = vld [vmem:[#allocation7 + $0x70] sm:$0xff]
    %v424 = vld [vmem:[#allocation7 + $0x78] sm:$0xff]
    %v425 = vld [vmem:[#allocation7 + $0x80] sm:$0xff]
    %v426 = vld [vmem:[#allocation7 + $0x88] sm:$0xff]
    %v427 = vld [vmem:[#allocation7 + $0x90] sm:$0xff]
    %v428 = vld [vmem:[#allocation7 + $0x98] sm:$0xff]
    %v429 = vld [vmem:[#allocation7 + $0xa0] sm:$0xff]
    %v430 = vld [vmem:[#allocation7 + $0xa8] sm:$0xff]
    %v431 = vld [vmem:[#allocation7 + $0xb0] sm:$0xff]
    %v432 = vld [vmem:[#allocation7 + $0xb8] sm:$0xff]
    %v433 = vld [vmem:[#allocation7 + $0xc0] sm:$0xff]
    %v434 = vld [vmem:[#allocation7 + $0xc8] sm:$0xff]
    %v435 = vld [vmem:[#allocation7 + $0xd0] sm:$0xff]
    %v436 = vld [vmem:[#allocation7 + $0xd8] sm:$0xff]
    %v437 = vld [vmem:[#allocation7 + $0xe0] sm:$0xff]
    %v438 = vld [vmem:[#allocation7 + $0xe8] sm:$0xff]
    %v439 = vld [vmem:[#allocation7 + $0xf0] sm:$0xff]
    %v440 = vld [vmem:[#allocation7 + $0xf8] sm:$0xff]
    %v441 = vld [vmem:[#allocation7 + $0x100] sm:$0xff]
    %v442 = vld [vmem:[#allocation7 + $0x108] sm:$0xff]
    %v443 = vld [vmem:[#allocation7 + $0x110] sm:$0xff]
    %v444 = vld [vmem:[#allocation7 + $0x118] sm:$0xff]
    %v445 = vld [vmem:[#allocation7 + $0x120] sm:$0xff]
    %v446 = vld [vmem:[#allocation7 + $0x128] sm:$0xff]
    %v447 = vld [vmem:[#allocation7 + $0x130] sm:$0xff]
    %v448 = vld [vmem:[#allocation7 + $0x138] sm:$0xff]
    %v449 = vld [vmem:[#allocation7 + $0x140] sm:$0xff]
    %v450 = vld [vmem:[#allocation7 + $0x148] sm:$0xff]
    %v451 = vld [vmem:[#allocation7 + $0x150] sm:$0xff]
    %v452 = vld [vmem:[#allocation7 + $0x158] sm:$0xff]
    %v453 = vld [vmem:[#allocation7 + $0x160] sm:$0xff]
    %v454 = vld [vmem:[#allocation7 + $0x168] sm:$0xff]
    %v455 = vld [vmem:[#allocation7 + $0x170] sm:$0xff]
    %v456 = vld [vmem:[#allocation7 + $0x178] sm:$0xff]
    %v457 = vld [vmem:[#allocation7 + $0x180] sm:$0xff]
    %v458 = vld [vmem:[#allocation7 + $0x188] sm:$0xff]
    %v459 = vld [vmem:[#allocation7 + $0x190] sm:$0xff]
    %v460 = vld [vmem:[#allocation7 + $0x198] sm:$0xff]
    %v461 = vld [vmem:[#allocation7 + $0x1a0] sm:$0xff]
    %v462 = vld [vmem:[#allocation7 + $0x1a8] sm:$0xff]
    %v463 = vld [vmem:[#allocation7 + $0x1b0] sm:$0xff]
    %v464 = vld [vmem:[#allocation7 + $0x1b8] sm:$0xff]
    %v465 = vld [vmem:[#allocation7 + $0x1c0] sm:$0xff]
    %v466 = vld [vmem:[#allocation7 + $0x1c8] sm:$0xff]
    %v467 = vld [vmem:[#allocation7 + $0x1d0] sm:$0xff]
    %v468 = vld [vmem:[#allocation7 + $0x1d8] sm:$0xff]
    %v469 = vld [vmem:[#allocation7 + $0x1e0] sm:$0xff]
    %v470 = vld [vmem:[#allocation7 + $0x1e8] sm:$0xff]
    %v471 = vld [vmem:[#allocation7 + $0x1f0] sm:$0xff]
    %v472 = vld [vmem:[#allocation7 + $0x1f8] sm:$0xff]
    %473 = vmatprep.subr.mxu0 %v410
    %474 = vmatpush1.msra.mxu0 %v409
    %475 = vmatprep.subr.mxu0 %v414
    %476 = vmatpush1.msra.mxu0 %v413
    %477 = vmatprep.subr.mxu0 %v418
    %478 = vmatpush1.msra.mxu0 %v417
    %479 = vmatprep.subr.mxu0 %v422
    %480 = vmatpush1.msra.mxu0 %v421
    %481 = vmatprep.subr.mxu0 %v426
    %482 = vmatpush1.msra.mxu0 %v425
    %483 = vmatprep.subr.mxu0 %v430
    %484 = vmatpush1.msra.mxu0 %v429
    %485 = vmatprep.subr.mxu0 %v434
    %486 = vmatpush1.msra.mxu0 %v433
    %487 = vmatprep.subr.mxu0 %v438
    %488 = vmatpush1.msra.mxu0 %v437
    %489 = vmatprep.subr.mxu0 %v442
    %490 = vmatpush1.msra.mxu0 %v441
    %491 = vmatprep.subr.mxu0 %v446
    %492 = vmatpush1.msra.mxu0 %v445
    %493 = vmatprep.subr.mxu0 %v450
    %494 = vmatpush1.msra.mxu0 %v449
    %495 = vmatprep.subr.mxu0 %v454
    %496 = vmatpush1.msra.mxu0 %v453
    %497 = vmatprep.subr.mxu0 %v458
    %498 = vmatpush1.msra.mxu0 %v457
    %499 = vmatprep.subr.mxu0 %v462
    %500 = vmatpush1.msra.mxu0 %v461
    %501 = vmatprep.subr.mxu0 %v466
    %502 = vmatpush1.msra.mxu0 %v465
    %503 = vmatprep.subr.mxu0 %v470
    %504 = vmatpush1.msra.mxu0 %v469
    %505 = vmatprep.subr.mxu0 0.0
    %506 = vmatpush1.msra.mxu0 0.0
    %507 = vmatprep.subr.mxu0 0.0
    %508 = vmatpush1.msra.mxu0 0.0
    %509 = vmatprep.subr.mxu0 0.0
    %510 = vmatpush1.msra.mxu0 0.0
    %511 = vmatprep.subr.mxu0 0.0
    %512 = vmatpush1.msra.mxu0 0.0
    %513 = vmatprep.subr.mxu0 0.0
    %514 = vmatpush1.msra.mxu0 0.0
    %515 = vmatprep.subr.mxu0 0.0
    %516 = vmatpush1.msra.mxu0 0.0
    %517 = vmatprep.subr.mxu0 0.0
    %518 = vmatpush1.msra.mxu0 0.0
    %519 = vmatprep.subr.mxu0 0.0
    %520 = vmatpush1.msra.mxu0 0.0
    %521 = vmatprep.subr.mxu0 0.0
    %522 = vmatpush1.msra.mxu0 0.0
    %523 = vmatprep.subr.mxu0 0.0
    %524 = vmatpush1.msra.mxu0 0.0
    %525 = vmatprep.subr.mxu0 0.0
    %526 = vmatpush1.msra.mxu0 0.0
    %527 = vmatprep.subr.mxu0 0.0
    %528 = vmatpush1.msra.mxu0 0.0
    %529 = vmatprep.subr.mxu0 0.0
    %530 = vmatpush1.msra.mxu0 0.0
    %531 = vmatprep.subr.mxu0 0.0
    %532 = vmatpush1.msra.mxu0 0.0
    %533 = vmatprep.subr.mxu0 0.0
    %534 = vmatpush1.msra.mxu0 0.0
    %535 = vmatprep.subr.mxu0 0.0
    %536 = vmatpush1.msra.mxu0 0.0
    %537 = vmatprep.mubr.f32.mxu0 0.0
    %538 = vmatmul.mubr.f32.gmra.mrb[0].mxu0 0.0
    %v539 = vpop.f32.mrb[0].mxu0
    %v540 = vadd.f32 0.0, %v539
    %v541 = vpop.f32.mrb[0].mxu0
    %v542 = vadd.f32 0.0, %v541
    %543 = vdwg.mxu0
    %544 = vmatprep.subr.mxu0 %v412
    %545 = vmatpush1.msra.mxu0 %v411
    %546 = vmatprep.subr.mxu0 %v416
    %547 = vmatpush1.msra.mxu0 %v415
    %548 = vmatprep.subr.mxu0 %v420
    %549 = vmatpush1.msra.mxu0 %v419
    %550 = vmatprep.subr.mxu0 %v424
    %551 = vmatpush1.msra.mxu0 %v423
    %552 = vmatprep.subr.mxu0 %v428
    %553 = vmatpush1.msra.mxu0 %v427
    %554 = vmatprep.subr.mxu0 %v432
    %555 = vmatpush1.msra.mxu0 %v431
    %556 = vmatprep.subr.mxu0 %v436
    %557 = vmatpush1.msra.mxu0 %v435
    %558 = vmatprep.subr.mxu0 %v440
    %559 = vmatpush1.msra.mxu0 %v439
    %560 = vmatprep.subr.mxu0 %v444
    %561 = vmatpush1.msra.mxu0 %v443
    %562 = vmatprep.subr.mxu0 %v448
    %563 = vmatpush1.msra.mxu0 %v447
    %564 = vmatprep.subr.mxu0 %v452
    %565 = vmatpush1.msra.mxu0 %v451
    %566 = vmatprep.subr.mxu0 %v456
    %567 = vmatpush1.msra.mxu0 %v455
    %568 = vmatprep.subr.mxu0 %v460
    %569 = vmatpush1.msra.mxu0 %v459
    %570 = vmatprep.subr.mxu0 %v464
    %571 = vmatpush1.msra.mxu0 %v463
    %572 = vmatprep.subr.mxu0 %v468
    %573 = vmatpush1.msra.mxu0 %v467
    %574 = vmatprep.subr.mxu0 %v472
    %575 = vmatpush1.msra.mxu0 %v471
    %576 = vmatprep.subr.mxu0 0.0
    %577 = vmatpush1.msra.mxu0 0.0
    %578 = vmatprep.subr.mxu0 0.0
    %579 = vmatpush1.msra.mxu0 0.0
    %580 = vmatprep.subr.mxu0 0.0
    %581 = vmatpush1.msra.mxu0 0.0
    %582 = vmatprep.subr.mxu0 0.0
    %583 = vmatpush1.msra.mxu0 0.0
    %584 = vmatprep.subr.mxu0 0.0
    %585 = vmatpush1.msra.mxu0 0.0
    %586 = vmatprep.subr.mxu0 0.0
    %587 = vmatpush1.msra.mxu0 0.0
    %588 = vmatprep.subr.mxu0 0.0
    %589 = vmatpush1.msra.mxu0 0.0
    %590 = vmatprep.subr.mxu0 0.0
    %591 = vmatpush1.msra.mxu0 0.0
    %592 = vmatprep.subr.mxu0 0.0
    %593 = vmatpush1.msra.mxu0 0.0
    %594 = vmatprep.subr.mxu0 0.0
    %595 = vmatpush1.msra.mxu0 0.0
    %596 = vmatprep.subr.mxu0 0.0
    %597 = vmatpush1.msra.mxu0 0.0
    %598 = vmatprep.subr.mxu0 0.0
    %599 = vmatpush1.msra.mxu0 0.0
    %600 = vmatprep.subr.mxu0 0.0
    %601 = vmatpush1.msra.mxu0 0.0
    %602 = vmatprep.subr.mxu0 0.0
    %603 = vmatpush1.msra.mxu0 0.0
    %604 = vmatprep.subr.mxu0 0.0
    %605 = vmatpush1.msra.mxu0 0.0
    %606 = vmatprep.subr.mxu0 0.0
    %607 = vmatpush1.msra.mxu0 0.0
    %608 = vmatprep.mubr.f32.mxu0 0.0
    %609 = vmatmul.mubr.f32.gmra.mrb[0].mxu0 0.0
    %v610 = vpop.f32.mrb[0].mxu0
    %v611 = vadd.f32 0.0, %v610
    %v612 = vpop.f32.mrb[0].mxu0
    %v613 = vadd.f32 0.0, %v612
    %614 = vdwg.mxu0
    %v615 = vadd.f32 %v322, %v540
    %v616 = vadd.f32 %v324, %v542
    %v617 = vadd.f32 %v399, %v611
    %v618 = vadd.f32 %v401, %v613
    %v619 = vxor.u32 %v615, 2147483648
    %v620 = vmul.f32 %v619, 1.442695
    %v621 = vpow.pop %v620
    %v622 = vadd.f32 %v621, 1.0
    %v623 = vrcp.pop %v622
    %v624 = vmul.f32 1.0, %v623
    %v625 = vxor.u32 %v616, 2147483648
    %v626 = vmul.f32 %v625, 1.442695
    %v627 = vpow.pop %v626
    %v628 = vadd.f32 %v627, 1.0
    %v629 = vrcp.pop %v628
    %v630 = vmul.f32 1.0, %v629
    %v631 = vtanh.pop %v617
    %v632 = vxor.u32 %v618, 2147483648
    %v633 = vmul.f32 %v632, 1.442695
    %v634 = vpow.pop %v633
    %v635 = vadd.f32 %v634, 1.0
    %v636 = vrcp.pop %v635
    %v637 = vmul.f32 1.0, %v636
    %v638 = vmul.f32 %v630, 0.0
    %v639 = vmul.f32 %v624, %v631
    %v640 = vadd.f32 %v638, %v639
    %v641 = vtanh.pop %v640
    %v642 = vmul.f32 %v637, %v641
    %643 = vmatprep.subr.mxu0 %v410
    %644 = vmatpush1.msra.mxu0 %v409
    %645 = vmatprep.subr.mxu0 %v414
    %646 = vmatpush1.msra.mxu0 %v413
    %647 = vmatprep.subr.mxu0 %v418
    %648 = vmatpush1.msra.mxu0 %v417
    %649 = vmatprep.subr.mxu0 %v422
    %650 = vmatpush1.msra.mxu0 %v421
    %651 = vmatprep.subr.mxu0 %v426
    %652 = vmatpush1.msra.mxu0 %v425
    %653 = vmatprep.subr.mxu0 %v430
    %654 = vmatpush1.msra.mxu0 %v429
    %655 = vmatprep.subr.mxu0 %v434
    %656 = vmatpush1.msra.mxu0 %v433
    %657 = vmatprep.subr.mxu0 %v438
    %658 = vmatpush1.msra.mxu0 %v437
    %659 = vmatprep.subr.mxu0 %v442
    %660 = vmatpush1.msra.mxu0 %v441
    %661 = vmatprep.subr.mxu0 %v446
    %662 = vmatpush1.msra.mxu0 %v445
    %663 = vmatprep.subr.mxu0 %v450
    %664 = vmatpush1.msra.mxu0 %v449
    %665 = vmatprep.subr.mxu0 %v454
    %666 = vmatpush1.msra.mxu0 %v453
    %667 = vmatprep.subr.mxu0 %v458
    %668 = vmatpush1.msra.mxu0 %v457
    %669 = vmatprep.subr.mxu0 %v462
    %670 = vmatpush1.msra.mxu0 %v461
    %671 = vmatprep.subr.mxu0 %v466
    %672 = vmatpush1.msra.mxu0 %v465
    %673 = vmatprep.subr.mxu0 %v470
    %674 = vmatpush1.msra.mxu0 %v469
    %675 = vmatprep.subr.mxu0 0.0
    %676 = vmatpush1.msra.mxu0 0.0
    %677 = vmatprep.subr.mxu0 0.0
    %678 = vmatpush1.msra.mxu0 0.0
    %679 = vmatprep.subr.mxu0 0.0
    %680 = vmatpush1.msra.mxu0 0.0
    %681 = vmatprep.subr.mxu0 0.0
    %682 = vmatpush1.msra.mxu0 0.0
    %683 = vmatprep.subr.mxu0 0.0
    %684 = vmatpush1.msra.mxu0 0.0
    %685 = vmatprep.subr.mxu0 0.0
    %686 = vmatpush1.msra.mxu0 0.0
    %687 = vmatprep.subr.mxu0 0.0
    %688 = vmatpush1.msra.mxu0 0.0
    %689 = vmatprep.subr.mxu0 0.0
    %690 = vmatpush1.msra.mxu0 0.0
    %691 = vmatprep.subr.mxu0 0.0
    %692 = vmatpush1.msra.mxu0 0.0
    %693 = vmatprep.subr.mxu0 0.0
    %694 = vmatpush1.msra.mxu0 0.0
    %695 = vmatprep.subr.mxu0 0.0
    %696 = vmatpush1.msra.mxu0 0.0
    %697 = vmatprep.subr.mxu0 0.0
    %698 = vmatpush1.msra.mxu0 0.0
    %699 = vmatprep.subr.mxu0 0.0
    %700 = vmatpush1.msra.mxu0 0.0
    %701 = vmatprep.subr.mxu0 0.0
    %702 = vmatpush1.msra.mxu0 0.0
    %703 = vmatprep.subr.mxu0 0.0
    %704 = vmatpush1.msra.mxu0 0.0
    %705 = vmatprep.subr.mxu0 0.0
    %706 = vmatpush1.msra.mxu0 0.0
    %707 = vmatprep.mubr.f32.mxu0 0.0
    %708 = vmatmul.mubr.f32.gmra.mrb[0].mxu0 %v642
    %v709 = vpop.f32.mrb[0].mxu0
    %v710 = vadd.f32 0.0, %v709
    %v711 = vpop.f32.mrb[0].mxu0
    %v712 = vadd.f32 0.0, %v711
    %713 = vdwg.mxu0
    %714 = vmatprep.subr.mxu0 %v412
    %715 = vmatpush1.msra.mxu0 %v411
    %716 = vmatprep.subr.mxu0 %v416
    %717 = vmatpush1.msra.mxu0 %v415
    %718 = vmatprep.subr.mxu0 %v420
    %719 = vmatpush1.msra.mxu0 %v419
    %720 = vmatprep.subr.mxu0 %v424
    %721 = vmatpush1.msra.mxu0 %v423
    %722 = vmatprep.subr.mxu0 %v428
    %723 = vmatpush1.msra.mxu0 %v427
    %724 = vmatprep.subr.mxu0 %v432
    %725 = vmatpush1.msra.mxu0 %v431
    %726 = vmatprep.subr.mxu0 %v436
    %727 = vmatpush1.msra.mxu0 %v435
    %728 = vmatprep.subr.mxu0 %v440
    %729 = vmatpush1.msra.mxu0 %v439
    %730 = vmatprep.subr.mxu0 %v444
    %731 = vmatpush1.msra.mxu0 %v443
    %732 = vmatprep.subr.mxu0 %v448
    %733 = vmatpush1.msra.mxu0 %v447
    %734 = vmatprep.subr.mxu0 %v452
    %735 = vmatpush1.msra.mxu0 %v451
    %736 = vmatprep.subr.mxu0 %v456
    %737 = vmatpush1.msra.mxu0 %v455
    %738 = vmatprep.subr.mxu0 %v460
    %739 = vmatpush1.msra.mxu0 %v459
    %740 = vmatprep.subr.mxu0 %v464
    %741 = vmatpush1.msra.mxu0 %v463
    %742 = vmatprep.subr.mxu0 %v468
    %743 = vmatpush1.msra.mxu0 %v467
    %744 = vmatprep.subr.mxu0 %v472
    %745 = vmatpush1.msra.mxu0 %v471
    %746 = vmatprep.subr.mxu0 0.0
    %747 = vmatpush1.msra.mxu0 0.0
    %748 = vmatprep.subr.mxu0 0.0
    %749 = vmatpush1.msra.mxu0 0.0
    %750 = vmatprep.subr.mxu0 0.0
    %751 = vmatpush1.msra.mxu0 0.0
    %752 = vmatprep.subr.mxu0 0.0
    %753 = vmatpush1.msra.mxu0 0.0
    %754 = vmatprep.subr.mxu0 0.0
    %755 = vmatpush1.msra.mxu0 0.0
    %756 = vmatprep.subr.mxu0 0.0
    %757 = vmatpush1.msra.mxu0 0.0
    %758 = vmatprep.subr.mxu0 0.0
    %759 = vmatpush1.msra.mxu0 0.0
    %760 = vmatprep.subr.mxu0 0.0
    %761 = vmatpush1.msra.mxu0 0.0
    %762 = vmatprep.subr.mxu0 0.0
    %763 = vmatpush1.msra.mxu0 0.0
    %764 = vmatprep.subr.mxu0 0.0
    %765 = vmatpush1.msra.mxu0 0.0
    %766 = vmatprep.subr.mxu0 0.0
    %767 = vmatpush1.msra.mxu0 0.0
    %768 = vmatprep.subr.mxu0 0.0
    %769 = vmatpush1.msra.mxu0 0.0
    %770 = vmatprep.subr.mxu0 0.0
    %771 = vmatpush1.msra.mxu0 0.0
    %772 = vmatprep.subr.mxu0 0.0
    %773 = vmatpush1.msra.mxu0 0.0
    %774 = vmatprep.subr.mxu0 0.0
    %775 = vmatpush1.msra.mxu0 0.0
    %776 = vmatprep.subr.mxu0 0.0
    %777 = vmatpush1.msra.mxu0 0.0
    %778 = vmatprep.mubr.f32.mxu0 0.0
    %779 = vmatmul.mubr.f32.gmra.mrb[0].mxu0 %v642
    %v780 = vpop.f32.mrb[0].mxu0
    %v781 = vadd.f32 0.0, %v780
    %v782 = vpop.f32.mrb[0].mxu0
    %v783 = vadd.f32 0.0, %v782
    %784 = vdwg.mxu0
    %v789 = vrot.slane %v710, 6
    %v790 = vrot.slane %v712, 6
    %v791 = vrot.slane %v781, 6
    %v792 = vrot.slane %v783, 6
    %v797 = vadd.f32 %v322, %v789
    %v798 = vadd.f32 %v324, %v790
    %v799 = vadd.f32 %v399, %v791
    %v800 = vadd.f32 %v401, %v792
    %v801 = vxor.u32 %v797, 2147483648
    %v802 = vmul.f32 %v801, 1.442695
    %v803 = vpow.pop %v802
    %v804 = vadd.f32 %v803, 1.0
    %v805 = vrcp.pop %v804
    %v806 = vmul.f32 1.0, %v805
    %v807 = vxor.u32 %v798, 2147483648
    %v808 = vmul.f32 %v807, 1.442695
    %v809 = vpow.pop %v808
    %v810 = vadd.f32 %v809, 1.0
    %v811 = vrcp.pop %v810
    %v812 = vmul.f32 1.0, %v811
    %v813 = vtanh.pop %v799
    %v814 = vxor.u32 %v800, 2147483648
    %v815 = vmul.f32 %v814, 1.442695
    %v816 = vpow.pop %v815
    %v817 = vadd.f32 %v816, 1.0
    %v818 = vrcp.pop %v817
    %v819 = vmul.f32 1.0, %v818
    %v821 = vrot.slane %v640, 6
    %v823 = vmul.f32 %v812, %v821
    %v824 = vmul.f32 %v806, %v813
    %v825 = vadd.f32 %v823, %v824
    %v826 = vtanh.pop %v825
    %v827 = vmul.f32 %v819, %v826
    %v829 = vrot.slane %v827, 2
    %831 = vmatprep.subr.mxu0 %v410
    %832 = vmatpush1.msra.mxu0 %v409
    %833 = vmatprep.subr.mxu0 %v414
    %834 = vmatpush1.msra.mxu0 %v413
    %835 = vmatprep.subr.mxu0 %v418
    %836 = vmatpush1.msra.mxu0 %v417
    %837 = vmatprep.subr.mxu0 %v422
    %838 = vmatpush1.msra.mxu0 %v421
    %839 = vmatprep.subr.mxu0 %v426
    %840 = vmatpush1.msra.mxu0 %v425
    %841 = vmatprep.subr.mxu0 %v430
    %842 = vmatpush1.msra.mxu0 %v429
    %843 = vmatprep.subr.mxu0 %v434
    %844 = vmatpush1.msra.mxu0 %v433
    %845 = vmatprep.subr.mxu0 %v438
    %846 = vmatpush1.msra.mxu0 %v437
    %847 = vmatprep.subr.mxu0 %v442
    %848 = vmatpush1.msra.mxu0 %v441
    %849 = vmatprep.subr.mxu0 %v446
    %850 = vmatpush1.msra.mxu0 %v445
    %851 = vmatprep.subr.mxu0 %v450
    %852 = vmatpush1.msra.mxu0 %v449
    %853 = vmatprep.subr.mxu0 %v454
    %854 = vmatpush1.msra.mxu0 %v453
    %855 = vmatprep.subr.mxu0 %v458
    %856 = vmatpush1.msra.mxu0 %v457
    %857 = vmatprep.subr.mxu0 %v462
    %858 = vmatpush1.msra.mxu0 %v461
    %859 = vmatprep.subr.mxu0 %v466
    %860 = vmatpush1.msra.mxu0 %v465
    %861 = vmatprep.subr.mxu0 %v470
    %862 = vmatpush1.msra.mxu0 %v469
    %863 = vmatprep.subr.mxu0 0.0
    %864 = vmatpush1.msra.mxu0 0.0
    %865 = vmatprep.subr.mxu0 0.0
    %866 = vmatpush1.msra.mxu0 0.0
    %867 = vmatprep.subr.mxu0 0.0
    %868 = vmatpush1.msra.mxu0 0.0
    %869 = vmatprep.subr.mxu0 0.0
    %870 = vmatpush1.msra.mxu0 0.0
    %871 = vmatprep.subr.mxu0 0.0
    %872 = vmatpush1.msra.mxu0 0.0
    %873 = vmatprep.subr.mxu0 0.0
    %874 = vmatpush1.msra.mxu0 0.0
    %875 = vmatprep.subr.mxu0 0.0
    %876 = vmatpush1.msra.mxu0 0.0
    %877 = vmatprep.subr.mxu0 0.0
    %878 = vmatpush1.msra.mxu0 0.0
    %879 = vmatprep.subr.mxu0 0.0
    %880 = vmatpush1.msra.mxu0 0.0
    %881 = vmatprep.subr.mxu0 0.0
    %882 = vmatpush1.msra.mxu0 0.0
    %883 = vmatprep.subr.mxu0 0.0
    %884 = vmatpush1.msra.mxu0 0.0
    %885 = vmatprep.subr.mxu0 0.0
    %886 = vmatpush1.msra.mxu0 0.0
    %887 = vmatprep.subr.mxu0 0.0
    %888 = vmatpush1.msra.mxu0 0.0
    %889 = vmatprep.subr.mxu0 0.0
    %890 = vmatpush1.msra.mxu0 0.0
    %891 = vmatprep.subr.mxu0 0.0
    %892 = vmatpush1.msra.mxu0 0.0
    %893 = vmatprep.subr.mxu0 0.0
    %894 = vmatpush1.msra.mxu0 0.0
    %895 = vmatprep.mubr.f32.mxu0 0.0
    %896 = vmatmul.mubr.f32.gmra.mrb[0].mxu0 %v829
    %v897 = vpop.f32.mrb[0].mxu0
    %v898 = vadd.f32 0.0, %v897
    %v899 = vpop.f32.mrb[0].mxu0
    %v900 = vadd.f32 0.0, %v899
    %901 = vdwg.mxu0
    %902 = vmatprep.subr.mxu0 %v412
    %903 = vmatpush1.msra.mxu0 %v411
    %904 = vmatprep.subr.mxu0 %v416
    %905 = vmatpush1.msra.mxu0 %v415
    %906 = vmatprep.subr.mxu0 %v420
    %907 = vmatpush1.msra.mxu0 %v419
    %908 = vmatprep.subr.mxu0 %v424
    %909 = vmatpush1.msra.mxu0 %v423
    %910 = vmatprep.subr.mxu0 %v428
    %911 = vmatpush1.msra.mxu0 %v427
    %912 = vmatprep.subr.mxu0 %v432
    %913 = vmatpush1.msra.mxu0 %v431
    %914 = vmatprep.subr.mxu0 %v436
    %915 = vmatpush1.msra.mxu0 %v435
    %916 = vmatprep.subr.mxu0 %v440
    %917 = vmatpush1.msra.mxu0 %v439
    %918 = vmatprep.subr.mxu0 %v444
    %919 = vmatpush1.msra.mxu0 %v443
    %920 = vmatprep.subr.mxu0 %v448
    %921 = vmatpush1.msra.mxu0 %v447
    %922 = vmatprep.subr.mxu0 %v452
    %923 = vmatpush1.msra.mxu0 %v451
    %924 = vmatprep.subr.mxu0 %v456
    %925 = vmatpush1.msra.mxu0 %v455
    %926 = vmatprep.subr.mxu0 %v460
    %927 = vmatpush1.msra.mxu0 %v459
    %928 = vmatprep.subr.mxu0 %v464
    %929 = vmatpush1.msra.mxu0 %v463
    %930 = vmatprep.subr.mxu0 %v468
    %931 = vmatpush1.msra.mxu0 %v467
    %932 = vmatprep.subr.mxu0 %v472
    %933 = vmatpush1.msra.mxu0 %v471
    %934 = vmatprep.subr.mxu0 0.0
    %935 = vmatpush1.msra.mxu0 0.0
    %936 = vmatprep.subr.mxu0 0.0
    %937 = vmatpush1.msra.mxu0 0.0
    %938 = vmatprep.subr.mxu0 0.0
    %939 = vmatpush1.msra.mxu0 0.0
    %940 = vmatprep.subr.mxu0 0.0
    %941 = vmatpush1.msra.mxu0 0.0
    %942 = vmatprep.subr.mxu0 0.0
    %943 = vmatpush1.msra.mxu0 0.0
    %944 = vmatprep.subr.mxu0 0.0
    %945 = vmatpush1.msra.mxu0 0.0
    %946 = vmatprep.subr.mxu0 0.0
    %947 = vmatpush1.msra.mxu0 0.0
    %948 = vmatprep.subr.mxu0 0.0
    %949 = vmatpush1.msra.mxu0 0.0
    %950 = vmatprep.subr.mxu0 0.0
    %951 = vmatpush1.msra.mxu0 0.0
    %952 = vmatprep.subr.mxu0 0.0
    %953 = vmatpush1.msra.mxu0 0.0
    %954 = vmatprep.subr.mxu0 0.0
    %955 = vmatpush1.msra.mxu0 0.0
    %956 = vmatprep.subr.mxu0 0.0
    %957 = vmatpush1.msra.mxu0 0.0
    %958 = vmatprep.subr.mxu0 0.0
    %959 = vmatpush1.msra.mxu0 0.0
    %960 = vmatprep.subr.mxu0 0.0
    %961 = vmatpush1.msra.mxu0 0.0
    %962 = vmatprep.subr.mxu0 0.0
    %963 = vmatpush1.msra.mxu0 0.0
    %964 = vmatprep.subr.mxu0 0.0
    %965 = vmatpush1.msra.mxu0 0.0
    %966 = vmatprep.mubr.f32.mxu0 0.0
    %967 = vmatmul.mubr.f32.gmra.mrb[0].mxu0 %v829
    %v968 = vpop.f32.mrb[0].mxu0
    %v969 = vadd.f32 0.0, %v968
    %v970 = vpop.f32.mrb[0].mxu0
    %v971 = vadd.f32 0.0, %v970
    %972 = vdwg.mxu0
    %v977 = vrot.slane %v898, 4
    %v978 = vrot.slane %v900, 4
    %v979 = vrot.slane %v969, 4
    %v980 = vrot.slane %v971, 4
    %v985 = vadd.f32 %v322, %v977
    %v986 = vadd.f32 %v324, %v978
    %v987 = vadd.f32 %v399, %v979
    %v988 = vadd.f32 %v401, %v980
    %v989 = vxor.u32 %v985, 2147483648
    %v990 = vmul.f32 %v989, 1.442695
    %v991 = vpow.pop %v990
    %v992 = vadd.f32 %v991, 1.0
    %v993 = vrcp.pop %v992
    %v994 = vmul.f32 1.0, %v993
    %v995 = vxor.u32 %v986, 2147483648
    %v996 = vmul.f32 %v995, 1.442695
    %v997 = vpow.pop %v996
    %v998 = vadd.f32 %v997, 1.0
    %v999 = vrcp.pop %v998
    %v1000 = vmul.f32 1.0, %v999
    %v1001 = vtanh.pop %v987
    %v1002 = vxor.u32 %v988, 2147483648
    %v1003 = vmul.f32 %v1002, 1.442695
    %v1004 = vpow.pop %v1003
    %v1005 = vadd.f32 %v1004, 1.0
    %v1006 = vrcp.pop %v1005
    %v1007 = vmul.f32 1.0, %v1006
    %v1009 = vrot.slane %v825, 6
    %v1011 = vmul.f32 %v1000, %v1009
    %v1012 = vmul.f32 %v994, %v1001
    %v1013 = vadd.f32 %v1011, %v1012
    %v1014 = vtanh.pop %v1013
    %v1015 = vmul.f32 %v1007, %v1014
    %v1017 = vrot.slane %v1015, 4
    %1019 = vmatprep.subr.mxu0 %v410
    %1020 = vmatpush1.msra.mxu0 %v409
    %1021 = vmatprep.subr.mxu0 %v414
    %1022 = vmatpush1.msra.mxu0 %v413
    %1023 = vmatprep.subr.mxu0 %v418
    %1024 = vmatpush1.msra.mxu0 %v417
    %1025 = vmatprep.subr.mxu0 %v422
    %1026 = vmatpush1.msra.mxu0 %v421
    %1027 = vmatprep.subr.mxu0 %v426
    %1028 = vmatpush1.msra.mxu0 %v425
    %1029 = vmatprep.subr.mxu0 %v430
    %1030 = vmatpush1.msra.mxu0 %v429
    %1031 = vmatprep.subr.mxu0 %v434
    %1032 = vmatpush1.msra.mxu0 %v433
    %1033 = vmatprep.subr.mxu0 %v438
    %1034 = vmatpush1.msra.mxu0 %v437
    %1035 = vmatprep.subr.mxu0 %v442
    %1036 = vmatpush1.msra.mxu0 %v441
    %1037 = vmatprep.subr.mxu0 %v446
    %1038 = vmatpush1.msra.mxu0 %v445
    %1039 = vmatprep.subr.mxu0 %v450
    %1040 = vmatpush1.msra.mxu0 %v449
    %1041 = vmatprep.subr.mxu0 %v454
    %1042 = vmatpush1.msra.mxu0 %v453
    %1043 = vmatprep.subr.mxu0 %v458
    %1044 = vmatpush1.msra.mxu0 %v457
    %1045 = vmatprep.subr.mxu0 %v462
    %1046 = vmatpush1.msra.mxu0 %v461
    %1047 = vmatprep.subr.mxu0 %v466
    %1048 = vmatpush1.msra.mxu0 %v465
    %1049 = vmatprep.subr.mxu0 %v470
    %1050 = vmatpush1.msra.mxu0 %v469
    %1051 = vmatprep.subr.mxu0 0.0
    %1052 = vmatpush1.msra.mxu0 0.0
    %1053 = vmatprep.subr.mxu0 0.0
    %1054 = vmatpush1.msra.mxu0 0.0
    %1055 = vmatprep.subr.mxu0 0.0
    %1056 = vmatpush1.msra.mxu0 0.0
    %1057 = vmatprep.subr.mxu0 0.0
    %1058 = vmatpush1.msra.mxu0 0.0
    %1059 = vmatprep.subr.mxu0 0.0
    %1060 = vmatpush1.msra.mxu0 0.0
    %1061 = vmatprep.subr.mxu0 0.0
    %1062 = vmatpush1.msra.mxu0 0.0
    %1063 = vmatprep.subr.mxu0 0.0
    %1064 = vmatpush1.msra.mxu0 0.0
    %1065 = vmatprep.subr.mxu0 0.0
    %1066 = vmatpush1.msra.mxu0 0.0
    %1067 = vmatprep.subr.mxu0 0.0
    %1068 = vmatpush1.msra.mxu0 0.0
    %1069 = vmatprep.subr.mxu0 0.0
    %1070 = vmatpush1.msra.mxu0 0.0
    %1071 = vmatprep.subr.mxu0 0.0
    %1072 = vmatpush1.msra.mxu0 0.0
    %1073 = vmatprep.subr.mxu0 0.0
    %1074 = vmatpush1.msra.mxu0 0.0
    %1075 = vmatprep.subr.mxu0 0.0
    %1076 = vmatpush1.msra.mxu0 0.0
    %1077 = vmatprep.subr.mxu0 0.0
    %1078 = vmatpush1.msra.mxu0 0.0
    %1079 = vmatprep.subr.mxu0 0.0
    %1080 = vmatpush1.msra.mxu0 0.0
    %1081 = vmatprep.subr.mxu0 0.0
    %1082 = vmatpush1.msra.mxu0 0.0
    %1083 = vmatprep.mubr.f32.mxu0 0.0
    %1084 = vmatmul.mubr.f32.gmra.mrb[0].mxu0 %v1017
    %v1085 = vpop.f32.mrb[0].mxu0
    %v1086 = vadd.f32 0.0, %v1085
    %v1087 = vpop.f32.mrb[0].mxu0
    %v1088 = vadd.f32 0.0, %v1087
    %1089 = vdwg.mxu0
    %1090 = vmatprep.subr.mxu0 %v412
    %1091 = vmatpush1.msra.mxu0 %v411
    %1092 = vmatprep.subr.mxu0 %v416
    %1093 = vmatpush1.msra.mxu0 %v415
    %1094 = vmatprep.subr.mxu0 %v420
    %1095 = vmatpush1.msra.mxu0 %v419
    %1096 = vmatprep.subr.mxu0 %v424
    %1097 = vmatpush1.msra.mxu0 %v423
    %1098 = vmatprep.subr.mxu0 %v428
    %1099 = vmatpush1.msra.mxu0 %v427
    %1100 = vmatprep.subr.mxu0 %v432
    %1101 = vmatpush1.msra.mxu0 %v431
    %1102 = vmatprep.subr.mxu0 %v436
    %1103 = vmatpush1.msra.mxu0 %v435
    %1104 = vmatprep.subr.mxu0 %v440
    %1105 = vmatpush1.msra.mxu0 %v439
    %1106 = vmatprep.subr.mxu0 %v444
    %1107 = vmatpush1.msra.mxu0 %v443
    %1108 = vmatprep.subr.mxu0 %v448
    %1109 = vmatpush1.msra.mxu0 %v447
    %1110 = vmatprep.subr.mxu0 %v452
    %1111 = vmatpush1.msra.mxu0 %v451
    %1112 = vmatprep.subr.mxu0 %v456
    %1113 = vmatpush1.msra.mxu0 %v455
    %1114 = vmatprep.subr.mxu0 %v460
    %1115 = vmatpush1.msra.mxu0 %v459
    %1116 = vmatprep.subr.mxu0 %v464
    %1117 = vmatpush1.msra.mxu0 %v463
    %1118 = vmatprep.subr.mxu0 %v468
    %1119 = vmatpush1.msra.mxu0 %v467
    %1120 = vmatprep.subr.mxu0 %v472
    %1121 = vmatpush1.msra.mxu0 %v471
    %1122 = vmatprep.subr.mxu0 0.0
    %1123 = vmatpush1.msra.mxu0 0.0
    %1124 = vmatprep.subr.mxu0 0.0
    %1125 = vmatpush1.msra.mxu0 0.0
    %1126 = vmatprep.subr.mxu0 0.0
    %1127 = vmatpush1.msra.mxu0 0.0
    %1128 = vmatprep.subr.mxu0 0.0
    %1129 = vmatpush1.msra.mxu0 0.0
    %1130 = vmatprep.subr.mxu0 0.0
    %1131 = vmatpush1.msra.mxu0 0.0
    %1132 = vmatprep.subr.mxu0 0.0
    %1133 = vmatpush1.msra.mxu0 0.0
    %1134 = vmatprep.subr.mxu0 0.0
    %1135 = vmatpush1.msra.mxu0 0.0
    %1136 = vmatprep.subr.mxu0 0.0
    %1137 = vmatpush1.msra.mxu0 0.0
    %1138 = vmatprep.subr.mxu0 0.0
    %1139 = vmatpush1.msra.mxu0 0.0
    %1140 = vmatprep.subr.mxu0 0.0
    %1141 = vmatpush1.msra.mxu0 0.0
    %1142 = vmatprep.subr.mxu0 0.0
    %1143 = vmatpush1.msra.mxu0 0.0
    %1144 = vmatprep.subr.mxu0 0.0
    %1145 = vmatpush1.msra.mxu0 0.0
    %1146 = vmatprep.subr.mxu0 0.0
    %1147 = vmatpush1.msra.mxu0 0.0
    %1148 = vmatprep.subr.mxu0 0.0
    %1149 = vmatpush1.msra.mxu0 0.0
    %1150 = vmatprep.subr.mxu0 0.0
    %1151 = vmatpush1.msra.mxu0 0.0
    %1152 = vmatprep.subr.mxu0 0.0
    %1153 = vmatpush1.msra.mxu0 0.0
    %1154 = vmatprep.mubr.f32.mxu0 0.0
    %1155 = vmatmul.mubr.f32.gmra.mrb[0].mxu0 %v1017
    %v1156 = vpop.f32.mrb[0].mxu0
    %v1157 = vadd.f32 0.0, %v1156
    %v1158 = vpop.f32.mrb[0].mxu0
    %v1159 = vadd.f32 0.0, %v1158
    %1160 = vdwg.mxu0
    %v1165 = vrot.slane %v1086, 2
    %v1166 = vrot.slane %v1088, 2
    %v1167 = vrot.slane %v1157, 2
    %v1168 = vrot.slane %v1159, 2
    %v1173 = vadd.f32 %v322, %v1165
    %v1174 = vadd.f32 %v324, %v1166
    %v1175 = vadd.f32 %v399, %v1167
    %v1176 = vadd.f32 %v401, %v1168
    %v1177 = vxor.u32 %v1173, 2147483648
    %v1178 = vmul.f32 %v1177, 1.442695
    %v1179 = vpow.pop %v1178
    %v1180 = vadd.f32 %v1179, 1.0
    %v1181 = vrcp.pop %v1180
    %v1182 = vmul.f32 1.0, %v1181
    %v1183 = vxor.u32 %v1174, 2147483648
    %v1184 = vmul.f32 %v1183, 1.442695
    %v1185 = vpow.pop %v1184
    %v1186 = vadd.f32 %v1185, 1.0
    %v1187 = vrcp.pop %v1186
    %v1188 = vmul.f32 1.0, %v1187
    %v1189 = vtanh.pop %v1175
    %v1190 = vxor.u32 %v1176, 2147483648
    %v1191 = vmul.f32 %v1190, 1.442695
    %v1192 = vpow.pop %v1191
    %v1193 = vadd.f32 %v1192, 1.0
    %v1194 = vrcp.pop %v1193
    %v1195 = vmul.f32 1.0, %v1194
    %v1197 = vrot.slane %v1013, 6
    %v1199 = vmul.f32 %v1188, %v1197
    %v1200 = vmul.f32 %v1182, %v1189
    %v1201 = vadd.f32 %v1199, %v1200
    %v1202 = vtanh.pop %v1201
    %v1203 = vmul.f32 %v1195, %v1202
    %v1205 = vrot.slane %v1203, 6
    %1207 = vmatprep.subr.mxu0 %v410
    %1208 = vmatpush1.msra.mxu0 %v409
    %1209 = vmatprep.subr.mxu0 %v414
    %1210 = vmatpush1.msra.mxu0 %v413
    %1211 = vmatprep.subr.mxu0 %v418
    %1212 = vmatpush1.msra.mxu0 %v417
    %1213 = vmatprep.subr.mxu0 %v422
    %1214 = vmatpush1.msra.mxu0 %v421
    %1215 = vmatprep.subr.mxu0 %v426
    %1216 = vmatpush1.msra.mxu0 %v425
    %1217 = vmatprep.subr.mxu0 %v430
    %1218 = vmatpush1.msra.mxu0 %v429
    %1219 = vmatprep.subr.mxu0 %v434
    %1220 = vmatpush1.msra.mxu0 %v433
    %1221 = vmatprep.subr.mxu0 %v438
    %1222 = vmatpush1.msra.mxu0 %v437
    %1223 = vmatprep.subr.mxu0 %v442
    %1224 = vmatpush1.msra.mxu0 %v441
    %1225 = vmatprep.subr.mxu0 %v446
    %1226 = vmatpush1.msra.mxu0 %v445
    %1227 = vmatprep.subr.mxu0 %v450
    %1228 = vmatpush1.msra.mxu0 %v449
    %1229 = vmatprep.subr.mxu0 %v454
    %1230 = vmatpush1.msra.mxu0 %v453
    %1231 = vmatprep.subr.mxu0 %v458
    %1232 = vmatpush1.msra.mxu0 %v457
    %1233 = vmatprep.subr.mxu0 %v462
    %1234 = vmatpush1.msra.mxu0 %v461
    %1235 = vmatprep.subr.mxu0 %v466
    %1236 = vmatpush1.msra.mxu0 %v465
    %1237 = vmatprep.subr.mxu0 %v470
    %1238 = vmatpush1.msra.mxu0 %v469
    %1239 = vmatprep.subr.mxu0 0.0
    %1240 = vmatpush1.msra.mxu0 0.0
    %1241 = vmatprep.subr.mxu0 0.0
    %1242 = vmatpush1.msra.mxu0 0.0
    %1243 = vmatprep.subr.mxu0 0.0
    %1244 = vmatpush1.msra.mxu0 0.0
    %1245 = vmatprep.subr.mxu0 0.0
    %1246 = vmatpush1.msra.mxu0 0.0
    %1247 = vmatprep.subr.mxu0 0.0
    %1248 = vmatpush1.msra.mxu0 0.0
    %1249 = vmatprep.subr.mxu0 0.0
    %1250 = vmatpush1.msra.mxu0 0.0
    %1251 = vmatprep.subr.mxu0 0.0
    %1252 = vmatpush1.msra.mxu0 0.0
    %1253 = vmatprep.subr.mxu0 0.0
    %1254 = vmatpush1.msra.mxu0 0.0
    %1255 = vmatprep.subr.mxu0 0.0
    %1256 = vmatpush1.msra.mxu0 0.0
    %1257 = vmatprep.subr.mxu0 0.0
    %1258 = vmatpush1.msra.mxu0 0.0
    %1259 = vmatprep.subr.mxu0 0.0
    %1260 = vmatpush1.msra.mxu0 0.0
    %1261 = vmatprep.subr.mxu0 0.0
    %1262 = vmatpush1.msra.mxu0 0.0
    %1263 = vmatprep.subr.mxu0 0.0
    %1264 = vmatpush1.msra.mxu0 0.0
    %1265 = vmatprep.subr.mxu0 0.0
    %1266 = vmatpush1.msra.mxu0 0.0
    %1267 = vmatprep.subr.mxu0 0.0
    %1268 = vmatpush1.msra.mxu0 0.0
    %1269 = vmatprep.subr.mxu0 0.0
    %1270 = vmatpush1.msra.mxu0 0.0
    %1271 = vmatprep.mubr.f32.mxu0 0.0
    %1272 = vmatmul.mubr.f32.gmra.mrb[0].mxu0 %v1205
    %v1273 = vpop.f32.mrb[0].mxu0
    %v1274 = vadd.f32 0.0, %v1273
    %v1275 = vpop.f32.mrb[0].mxu0
    %v1276 = vadd.f32 0.0, %v1275
    %1277 = vdwg.mxu0
    %1278 = vmatprep.subr.mxu0 %v412
    %1279 = vmatpush1.msra.mxu0 %v411
    %1280 = vmatprep.subr.mxu0 %v416
    %1281 = vmatpush1.msra.mxu0 %v415
    %1282 = vmatprep.subr.mxu0 %v420
    %1283 = vmatpush1.msra.mxu0 %v419
    %1284 = vmatprep.subr.mxu0 %v424
    %1285 = vmatpush1.msra.mxu0 %v423
    %1286 = vmatprep.subr.mxu0 %v428
    %1287 = vmatpush1.msra.mxu0 %v427
    %1288 = vmatprep.subr.mxu0 %v432
    %1289 = vmatpush1.msra.mxu0 %v431
    %1290 = vmatprep.subr.mxu0 %v436
    %1291 = vmatpush1.msra.mxu0 %v435
    %1292 = vmatprep.subr.mxu0 %v440
    %1293 = vmatpush1.msra.mxu0 %v439
    %1294 = vmatprep.subr.mxu0 %v444
    %1295 = vmatpush1.msra.mxu0 %v443
    %1296 = vmatprep.subr.mxu0 %v448
    %1297 = vmatpush1.msra.mxu0 %v447
    %1298 = vmatprep.subr.mxu0 %v452
    %1299 = vmatpush1.msra.mxu0 %v451
    %1300 = vmatprep.subr.mxu0 %v456
    %1301 = vmatpush1.msra.mxu0 %v455
    %1302 = vmatprep.subr.mxu0 %v460
    %1303 = vmatpush1.msra.mxu0 %v459
    %1304 = vmatprep.subr.mxu0 %v464
    %1305 = vmatpush1.msra.mxu0 %v463
    %1306 = vmatprep.subr.mxu0 %v468
    %1307 = vmatpush1.msra.mxu0 %v467
    %1308 = vmatprep.subr.mxu0 %v472
    %1309 = vmatpush1.msra.mxu0 %v471
    %1310 = vmatprep.subr.mxu0 0.0
    %1311 = vmatpush1.msra.mxu0 0.0
    %1312 = vmatprep.subr.mxu0 0.0
    %1313 = vmatpush1.msra.mxu0 0.0
    %1314 = vmatprep.subr.mxu0 0.0
    %1315 = vmatpush1.msra.mxu0 0.0
    %1316 = vmatprep.subr.mxu0 0.0
    %1317 = vmatpush1.msra.mxu0 0.0
    %1318 = vmatprep.subr.mxu0 0.0
    %1319 = vmatpush1.msra.mxu0 0.0
    %1320 = vmatprep.subr.mxu0 0.0
    %1321 = vmatpush1.msra.mxu0 0.0
    %1322 = vmatprep.subr.mxu0 0.0
    %1323 = vmatpush1.msra.mxu0 0.0
    %1324 = vmatprep.subr.mxu0 0.0
    %1325 = vmatpush1.msra.mxu0 0.0
    %1326 = vmatprep.subr.mxu0 0.0
    %1327 = vmatpush1.msra.mxu0 0.0
    %1328 = vmatprep.subr.mxu0 0.0
    %1329 = vmatpush1.msra.mxu0 0.0
    %1330 = vmatprep.subr.mxu0 0.0
    %1331 = vmatpush1.msra.mxu0 0.0
    %1332 = vmatprep.subr.mxu0 0.0
    %1333 = vmatpush1.msra.mxu0 0.0
    %1334 = vmatprep.subr.mxu0 0.0
    %1335 = vmatpush1.msra.mxu0 0.0
    %1336 = vmatprep.subr.mxu0 0.0
    %1337 = vmatpush1.msra.mxu0 0.0
    %1338 = vmatprep.subr.mxu0 0.0
    %1339 = vmatpush1.msra.mxu0 0.0
    %1340 = vmatprep.subr.mxu0 0.0
    %1341 = vmatpush1.msra.mxu0 0.0
    %1342 = vmatprep.mubr.f32.mxu0 0.0
    %1343 = vmatmul.mubr.f32.gmra.mrb[0].mxu0 %v1205
    %v1344 = vpop.f32.mrb[0].mxu0
    %v1345 = vadd.f32 0.0, %v1344
    %v1346 = vpop.f32.mrb[0].mxu0
    %v1347 = vadd.f32 0.0, %v1346
    %1348 = vdwg.mxu0
    %v1349 = vadd.f32 %v328, %v1274
    %v1350 = vadd.f32 %v330, %v1276
    %v1351 = vadd.f32 %v405, %v1345
    %v1352 = vadd.f32 %v407, %v1347
    %v1353 = vxor.u32 %v1349, 2147483648
    %v1354 = vmul.f32 %v1353, 1.442695
    %v1355 = vpow.pop %v1354
    %v1356 = vadd.f32 %v1355, 1.0
    %v1357 = vrcp.pop %v1356
    %v1358 = vmul.f32 1.0, %v1357
    %v1359 = vxor.u32 %v1350, 2147483648
    %v1360 = vmul.f32 %v1359, 1.442695
    %v1361 = vpow.pop %v1360
    %v1362 = vadd.f32 %v1361, 1.0
    %v1363 = vrcp.pop %v1362
    %v1364 = vmul.f32 1.0, %v1363
    %v1365 = vtanh.pop %v1351
    %v1366 = vxor.u32 %v1352, 2147483648
    %v1367 = vmul.f32 %v1366, 1.442695
    %v1368 = vpow.pop %v1367
    %v1369 = vadd.f32 %v1368, 1.0
    %v1370 = vrcp.pop %v1369
    %v1371 = vmul.f32 1.0, %v1370
    %v1373 = vrot.slane %v1201, 6
    %v1375 = vmul.f32 %v1364, %v1373
    %v1376 = vmul.f32 %v1358, %v1365
    %v1377 = vadd.f32 %v1375, %v1376
    %v1378 = vtanh.pop %v1377
    %v1379 = vmul.f32 %v1371, %v1378
    %1380 = vmatprep.subr.mxu0 %v410
    %1381 = vmatpush1.msra.mxu0 %v409
    %1382 = vmatprep.subr.mxu0 %v414
    %1383 = vmatpush1.msra.mxu0 %v413
    %1384 = vmatprep.subr.mxu0 %v418
    %1385 = vmatpush1.msra.mxu0 %v417
    %1386 = vmatprep.subr.mxu0 %v422
    %1387 = vmatpush1.msra.mxu0 %v421
    %1388 = vmatprep.subr.mxu0 %v426
    %1389 = vmatpush1.msra.mxu0 %v425
    %1390 = vmatprep.subr.mxu0 %v430
    %1391 = vmatpush1.msra.mxu0 %v429
    %1392 = vmatprep.subr.mxu0 %v434
    %1393 = vmatpush1.msra.mxu0 %v433
    %1394 = vmatprep.subr.mxu0 %v438
    %1395 = vmatpush1.msra.mxu0 %v437
    %1396 = vmatprep.subr.mxu0 %v442
    %1397 = vmatpush1.msra.mxu0 %v441
    %1398 = vmatprep.subr.mxu0 %v446
    %1399 = vmatpush1.msra.mxu0 %v445
    %1400 = vmatprep.subr.mxu0 %v450
    %1401 = vmatpush1.msra.mxu0 %v449
    %1402 = vmatprep.subr.mxu0 %v454
    %1403 = vmatpush1.msra.mxu0 %v453
    %1404 = vmatprep.subr.mxu0 %v458
    %1405 = vmatpush1.msra.mxu0 %v457
    %1406 = vmatprep.subr.mxu0 %v462
    %1407 = vmatpush1.msra.mxu0 %v461
    %1408 = vmatprep.subr.mxu0 %v466
    %1409 = vmatpush1.msra.mxu0 %v465
    %1410 = vmatprep.subr.mxu0 %v470
    %1411 = vmatpush1.msra.mxu0 %v469
    %1412 = vmatprep.subr.mxu0 0.0
    %1413 = vmatpush1.msra.mxu0 0.0
    %1414 = vmatprep.subr.mxu0 0.0
    %1415 = vmatpush1.msra.mxu0 0.0
    %1416 = vmatprep.subr.mxu0 0.0
    %1417 = vmatpush1.msra.mxu0 0.0
    %1418 = vmatprep.subr.mxu0 0.0
    %1419 = vmatpush1.msra.mxu0 0.0
    %1420 = vmatprep.subr.mxu0 0.0
    %1421 = vmatpush1.msra.mxu0 0.0
    %1422 = vmatprep.subr.mxu0 0.0
    %1423 = vmatpush1.msra.mxu0 0.0
    %1424 = vmatprep.subr.mxu0 0.0
    %1425 = vmatpush1.msra.mxu0 0.0
    %1426 = vmatprep.subr.mxu0 0.0
    %1427 = vmatpush1.msra.mxu0 0.0
    %1428 = vmatprep.subr.mxu0 0.0
    %1429 = vmatpush1.msra.mxu0 0.0
    %1430 = vmatprep.subr.mxu0 0.0
    %1431 = vmatpush1.msra.mxu0 0.0
    %1432 = vmatprep.subr.mxu0 0.0
    %1433 = vmatpush1.msra.mxu0 0.0
    %1434 = vmatprep.subr.mxu0 0.0
    %1435 = vmatpush1.msra.mxu0 0.0
    %1436 = vmatprep.subr.mxu0 0.0
    %1437 = vmatpush1.msra.mxu0 0.0
    %1438 = vmatprep.subr.mxu0 0.0
    %1439 = vmatpush1.msra.mxu0 0.0
    %1440 = vmatprep.subr.mxu0 0.0
    %1441 = vmatpush1.msra.mxu0 0.0
    %1442 = vmatprep.subr.mxu0 0.0
    %1443 = vmatpush1.msra.mxu0 0.0
    %1444 = vmatprep.mubr.f32.mxu0 0.0
    %1445 = vmatmul.mubr.f32.gmra.mrb[0].mxu0 %v1379
    %v1446 = vpop.f32.mrb[0].mxu0
    %v1447 = vadd.f32 0.0, %v1446
    %v1448 = vpop.f32.mrb[0].mxu0
    %v1449 = vadd.f32 0.0, %v1448
    %1450 = vdwg.mxu0
    %1451 = vmatprep.subr.mxu0 %v412
    %1452 = vmatpush1.msra.mxu0 %v411
    %1453 = vmatprep.subr.mxu0 %v416
    %1454 = vmatpush1.msra.mxu0 %v415
    %1455 = vmatprep.subr.mxu0 %v420
    %1456 = vmatpush1.msra.mxu0 %v419
    %1457 = vmatprep.subr.mxu0 %v424
    %1458 = vmatpush1.msra.mxu0 %v423
    %1459 = vmatprep.subr.mxu0 %v428
    %1460 = vmatpush1.msra.mxu0 %v427
    %1461 = vmatprep.subr.mxu0 %v432
    %1462 = vmatpush1.msra.mxu0 %v431
    %1463 = vmatprep.subr.mxu0 %v436
    %1464 = vmatpush1.msra.mxu0 %v435
    %1465 = vmatprep.subr.mxu0 %v440
    %1466 = vmatpush1.msra.mxu0 %v439
    %1467 = vmatprep.subr.mxu0 %v444
    %1468 = vmatpush1.msra.mxu0 %v443
    %1469 = vmatprep.subr.mxu0 %v448
    %1470 = vmatpush1.msra.mxu0 %v447
    %1471 = vmatprep.subr.mxu0 %v452
    %1472 = vmatpush1.msra.mxu0 %v451
    %1473 = vmatprep.subr.mxu0 %v456
    %1474 = vmatpush1.msra.mxu0 %v455
    %1475 = vmatprep.subr.mxu0 %v460
    %1476 = vmatpush1.msra.mxu0 %v459
    %1477 = vmatprep.subr.mxu0 %v464
    %1478 = vmatpush1.msra.mxu0 %v463
    %1479 = vmatprep.subr.mxu0 %v468
    %1480 = vmatpush1.msra.mxu0 %v467
    %1481 = vmatprep.subr.mxu0 %v472
    %1482 = vmatpush1.msra.mxu0 %v471
    %1483 = vmatprep.subr.mxu0 0.0
    %1484 = vmatpush1.msra.mxu0 0.0
    %1485 = vmatprep.subr.mxu0 0.0
    %1486 = vmatpush1.msra.mxu0 0.0
    %1487 = vmatprep.subr.mxu0 0.0
    %1488 = vmatpush1.msra.mxu0 0.0
    %1489 = vmatprep.subr.mxu0 0.0
    %1490 = vmatpush1.msra.mxu0 0.0
    %1491 = vmatprep.subr.mxu0 0.0
    %1492 = vmatpush1.msra.mxu0 0.0
    %1493 = vmatprep.subr.mxu0 0.0
    %1494 = vmatpush1.msra.mxu0 0.0
    %1495 = vmatprep.subr.mxu0 0.0
    %1496 = vmatpush1.msra.mxu0 0.0
    %1497 = vmatprep.subr.mxu0 0.0
    %1498 = vmatpush1.msra.mxu0 0.0
    %1499 = vmatprep.subr.mxu0 0.0
    %1500 = vmatpush1.msra.mxu0 0.0
    %1501 = vmatprep.subr.mxu0 0.0
    %1502 = vmatpush1.msra.mxu0 0.0
    %1503 = vmatprep.subr.mxu0 0.0
    %1504 = vmatpush1.msra.mxu0 0.0
    %1505 = vmatprep.subr.mxu0 0.0
    %1506 = vmatpush1.msra.mxu0 0.0
    %1507 = vmatprep.subr.mxu0 0.0
    %1508 = vmatpush1.msra.mxu0 0.0
    %1509 = vmatprep.subr.mxu0 0.0
    %1510 = vmatpush1.msra.mxu0 0.0
    %1511 = vmatprep.subr.mxu0 0.0
    %1512 = vmatpush1.msra.mxu0 0.0
    %1513 = vmatprep.subr.mxu0 0.0
    %1514 = vmatpush1.msra.mxu0 0.0
    %1515 = vmatprep.mubr.f32.mxu0 0.0
    %1516 = vmatmul.mubr.f32.gmra.mrb[0].mxu0 %v1379
    %v1517 = vpop.f32.mrb[0].mxu0
    %v1518 = vadd.f32 0.0, %v1517
    %v1519 = vpop.f32.mrb[0].mxu0
    %v1520 = vadd.f32 0.0, %v1519
    %1521 = vdwg.mxu0
    %v1526 = vrot.slane %v1447, 6
    %v1527 = vrot.slane %v1449, 6
    %v1528 = vrot.slane %v1518, 6
    %v1529 = vrot.slane %v1520, 6
    %v1534 = vadd.f32 %v328, %v1526
    %v1535 = vadd.f32 %v330, %v1527
    %v1536 = vadd.f32 %v405, %v1528
    %v1537 = vadd.f32 %v407, %v1529
    %v1538 = vxor.u32 %v1534, 2147483648
    %v1539 = vmul.f32 %v1538, 1.442695
    %v1540 = vpow.pop %v1539
    %v1541 = vadd.f32 %v1540, 1.0
    %v1542 = vrcp.pop %v1541
    %v1543 = vmul.f32 1.0, %v1542
    %v1544 = vxor.u32 %v1535, 2147483648
    %v1545 = vmul.f32 %v1544, 1.442695
    %v1546 = vpow.pop %v1545
    %v1547 = vadd.f32 %v1546, 1.0
    %v1548 = vrcp.pop %v1547
    %v1549 = vmul.f32 1.0, %v1548
    %v1550 = vtanh.pop %v1536
    %v1551 = vxor.u32 %v1537, 2147483648
    %v1552 = vmul.f32 %v1551, 1.442695
    %v1553 = vpow.pop %v1552
    %v1554 = vadd.f32 %v1553, 1.0
    %v1555 = vrcp.pop %v1554
    %v1556 = vmul.f32 1.0, %v1555
    %v1558 = vrot.slane %v1377, 6
    %v1560 = vmul.f32 %v1549, %v1558
    %v1561 = vmul.f32 %v1543, %v1550
    %v1562 = vadd.f32 %v1560, %v1561
    %v1563 = vtanh.pop %v1562
    %v1564 = vmul.f32 %v1556, %v1563
    %v1566 = vrot.slane %v1564, 2
    %1568 = vmatprep.subr.mxu0 %v410
    %1569 = vmatpush1.msra.mxu0 %v409
    %1570 = vmatprep.subr.mxu0 %v414
    %1571 = vmatpush1.msra.mxu0 %v413
    %1572 = vmatprep.subr.mxu0 %v418
    %1573 = vmatpush1.msra.mxu0 %v417
    %1574 = vmatprep.subr.mxu0 %v422
    %1575 = vmatpush1.msra.mxu0 %v421
    %1576 = vmatprep.subr.mxu0 %v426
    %1577 = vmatpush1.msra.mxu0 %v425
    %1578 = vmatprep.subr.mxu0 %v430
    %1579 = vmatpush1.msra.mxu0 %v429
    %1580 = vmatprep.subr.mxu0 %v434
    %1581 = vmatpush1.msra.mxu0 %v433
    %1582 = vmatprep.subr.mxu0 %v438
    %1583 = vmatpush1.msra.mxu0 %v437
    %1584 = vmatprep.subr.mxu0 %v442
    %1585 = vmatpush1.msra.mxu0 %v441
    %1586 = vmatprep.subr.mxu0 %v446
    %1587 = vmatpush1.msra.mxu0 %v445
    %1588 = vmatprep.subr.mxu0 %v450
    %1589 = vmatpush1.msra.mxu0 %v449
    %1590 = vmatprep.subr.mxu0 %v454
    %1591 = vmatpush1.msra.mxu0 %v453
    %1592 = vmatprep.subr.mxu0 %v458
    %1593 = vmatpush1.msra.mxu0 %v457
    %1594 = vmatprep.subr.mxu0 %v462
    %1595 = vmatpush1.msra.mxu0 %v461
    %1596 = vmatprep.subr.mxu0 %v466
    %1597 = vmatpush1.msra.mxu0 %v465
    %1598 = vmatprep.subr.mxu0 %v470
    %1599 = vmatpush1.msra.mxu0 %v469
    %1600 = vmatprep.subr.mxu0 0.0
    %1601 = vmatpush1.msra.mxu0 0.0
    %1602 = vmatprep.subr.mxu0 0.0
    %1603 = vmatpush1.msra.mxu0 0.0
    %1604 = vmatprep.subr.mxu0 0.0
    %1605 = vmatpush1.msra.mxu0 0.0
    %1606 = vmatprep.subr.mxu0 0.0
    %1607 = vmatpush1.msra.mxu0 0.0
    %1608 = vmatprep.subr.mxu0 0.0
    %1609 = vmatpush1.msra.mxu0 0.0
    %1610 = vmatprep.subr.mxu0 0.0
    %1611 = vmatpush1.msra.mxu0 0.0
    %1612 = vmatprep.subr.mxu0 0.0
    %1613 = vmatpush1.msra.mxu0 0.0
    %1614 = vmatprep.subr.mxu0 0.0
    %1615 = vmatpush1.msra.mxu0 0.0
    %1616 = vmatprep.subr.mxu0 0.0
    %1617 = vmatpush1.msra.mxu0 0.0
    %1618 = vmatprep.subr.mxu0 0.0
    %1619 = vmatpush1.msra.mxu0 0.0
    %1620 = vmatprep.subr.mxu0 0.0
    %1621 = vmatpush1.msra.mxu0 0.0
    %1622 = vmatprep.subr.mxu0 0.0
    %1623 = vmatpush1.msra.mxu0 0.0
    %1624 = vmatprep.subr.mxu0 0.0
    %1625 = vmatpush1.msra.mxu0 0.0
    %1626 = vmatprep.subr.mxu0 0.0
    %1627 = vmatpush1.msra.mxu0 0.0
    %1628 = vmatprep.subr.mxu0 0.0
    %1629 = vmatpush1.msra.mxu0 0.0
    %1630 = vmatprep.subr.mxu0 0.0
    %1631 = vmatpush1.msra.mxu0 0.0
    %1632 = vmatprep.mubr.f32.mxu0 0.0
    %1633 = vmatmul.mubr.f32.gmra.mrb[0].mxu0 %v1566
    %v1634 = vpop.f32.mrb[0].mxu0
    %v1635 = vadd.f32 0.0, %v1634
    %v1636 = vpop.f32.mrb[0].mxu0
    %v1637 = vadd.f32 0.0, %v1636
    %1638 = vdwg.mxu0
    %1639 = vmatprep.subr.mxu0 %v412
    %1640 = vmatpush1.msra.mxu0 %v411
    %1641 = vmatprep.subr.mxu0 %v416
    %1642 = vmatpush1.msra.mxu0 %v415
    %1643 = vmatprep.subr.mxu0 %v420
    %1644 = vmatpush1.msra.mxu0 %v419
    %1645 = vmatprep.subr.mxu0 %v424
    %1646 = vmatpush1.msra.mxu0 %v423
    %1647 = vmatprep.subr.mxu0 %v428
    %1648 = vmatpush1.msra.mxu0 %v427
    %1649 = vmatprep.subr.mxu0 %v432
    %1650 = vmatpush1.msra.mxu0 %v431
    %1651 = vmatprep.subr.mxu0 %v436
    %1652 = vmatpush1.msra.mxu0 %v435
    %1653 = vmatprep.subr.mxu0 %v440
    %1654 = vmatpush1.msra.mxu0 %v439
    %1655 = vmatprep.subr.mxu0 %v444
    %1656 = vmatpush1.msra.mxu0 %v443
    %1657 = vmatprep.subr.mxu0 %v448
    %1658 = vmatpush1.msra.mxu0 %v447
    %1659 = vmatprep.subr.mxu0 %v452
    %1660 = vmatpush1.msra.mxu0 %v451
    %1661 = vmatprep.subr.mxu0 %v456
    %1662 = vmatpush1.msra.mxu0 %v455
    %1663 = vmatprep.subr.mxu0 %v460
    %1664 = vmatpush1.msra.mxu0 %v459
    %1665 = vmatprep.subr.mxu0 %v464
    %1666 = vmatpush1.msra.mxu0 %v463
    %1667 = vmatprep.subr.mxu0 %v468
    %1668 = vmatpush1.msra.mxu0 %v467
    %1669 = vmatprep.subr.mxu0 %v472
    %1670 = vmatpush1.msra.mxu0 %v471
    %1671 = vmatprep.subr.mxu0 0.0
    %1672 = vmatpush1.msra.mxu0 0.0
    %1673 = vmatprep.subr.mxu0 0.0
    %1674 = vmatpush1.msra.mxu0 0.0
    %1675 = vmatprep.subr.mxu0 0.0
    %1676 = vmatpush1.msra.mxu0 0.0
    %1677 = vmatprep.subr.mxu0 0.0
    %1678 = vmatpush1.msra.mxu0 0.0
    %1679 = vmatprep.subr.mxu0 0.0
    %1680 = vmatpush1.msra.mxu0 0.0
    %1681 = vmatprep.subr.mxu0 0.0
    %1682 = vmatpush1.msra.mxu0 0.0
    %1683 = vmatprep.subr.mxu0 0.0
    %1684 = vmatpush1.msra.mxu0 0.0
    %1685 = vmatprep.subr.mxu0 0.0
    %1686 = vmatpush1.msra.mxu0 0.0
    %1687 = vmatprep.subr.mxu0 0.0
    %1688 = vmatpush1.msra.mxu0 0.0
    %1689 = vmatprep.subr.mxu0 0.0
    %1690 = vmatpush1.msra.mxu0 0.0
    %1691 = vmatprep.subr.mxu0 0.0
    %1692 = vmatpush1.msra.mxu0 0.0
    %1693 = vmatprep.subr.mxu0 0.0
    %1694 = vmatpush1.msra.mxu0 0.0
    %1695 = vmatprep.subr.mxu0 0.0
    %1696 = vmatpush1.msra.mxu0 0.0
    %1697 = vmatprep.subr.mxu0 0.0
    %1698 = vmatpush1.msra.mxu0 0.0
    %1699 = vmatprep.subr.mxu0 0.0
    %1700 = vmatpush1.msra.mxu0 0.0
    %1701 = vmatprep.subr.mxu0 0.0
    %1702 = vmatpush1.msra.mxu0 0.0
    %1703 = vmatprep.mubr.f32.mxu0 0.0
    %1704 = vmatmul.mubr.f32.gmra.mrb[0].mxu0 %v1566
    %v1705 = vpop.f32.mrb[0].mxu0
    %v1706 = vadd.f32 0.0, %v1705
    %v1707 = vpop.f32.mrb[0].mxu0
    %v1708 = vadd.f32 0.0, %v1707
    %1709 = vdwg.mxu0
    %v1714 = vrot.slane %v1635, 4
    %v1715 = vrot.slane %v1637, 4
    %v1716 = vrot.slane %v1706, 4
    %v1717 = vrot.slane %v1708, 4
    %v1722 = vadd.f32 %v328, %v1714
    %v1723 = vadd.f32 %v330, %v1715
    %v1724 = vadd.f32 %v405, %v1716
    %v1725 = vadd.f32 %v407, %v1717
    %v1726 = vxor.u32 %v1722, 2147483648
    %v1727 = vmul.f32 %v1726, 1.442695
    %v1728 = vpow.pop %v1727
    %v1729 = vadd.f32 %v1728, 1.0
    %v1730 = vrcp.pop %v1729
    %v1731 = vmul.f32 1.0, %v1730
    %v1732 = vxor.u32 %v1723, 2147483648
    %v1733 = vmul.f32 %v1732, 1.442695
    %v1734 = vpow.pop %v1733
    %v1735 = vadd.f32 %v1734, 1.0
    %v1736 = vrcp.pop %v1735
    %v1737 = vmul.f32 1.0, %v1736
    %v1738 = vtanh.pop %v1724
    %v1739 = vxor.u32 %v1725, 2147483648
    %v1740 = vmul.f32 %v1739, 1.442695
    %v1741 = vpow.pop %v1740
    %v1742 = vadd.f32 %v1741, 1.0
    %v1743 = vrcp.pop %v1742
    %v1744 = vmul.f32 1.0, %v1743
    %v1746 = vrot.slane %v1562, 6
    %v1748 = vmul.f32 %v1737, %v1746
    %v1749 = vmul.f32 %v1731, %v1738
    %v1750 = vadd.f32 %v1748, %v1749
    %v1751 = vtanh.pop %v1750
    %v1752 = vmul.f32 %v1744, %v1751
    %v1754 = vrot.slane %v1752, 4
    %1756 = vmatprep.subr.mxu0 %v410
    %1757 = vmatpush1.msra.mxu0 %v409
    %1758 = vmatprep.subr.mxu0 %v414
    %1759 = vmatpush1.msra.mxu0 %v413
    %1760 = vmatprep.subr.mxu0 %v418
    %1761 = vmatpush1.msra.mxu0 %v417
    %1762 = vmatprep.subr.mxu0 %v422
    %1763 = vmatpush1.msra.mxu0 %v421
    %1764 = vmatprep.subr.mxu0 %v426
    %1765 = vmatpush1.msra.mxu0 %v425
    %1766 = vmatprep.subr.mxu0 %v430
    %1767 = vmatpush1.msra.mxu0 %v429
    %1768 = vmatprep.subr.mxu0 %v434
    %1769 = vmatpush1.msra.mxu0 %v433
    %1770 = vmatprep.subr.mxu0 %v438
    %1771 = vmatpush1.msra.mxu0 %v437
    %1772 = vmatprep.subr.mxu0 %v442
    %1773 = vmatpush1.msra.mxu0 %v441
    %1774 = vmatprep.subr.mxu0 %v446
    %1775 = vmatpush1.msra.mxu0 %v445
    %1776 = vmatprep.subr.mxu0 %v450
    %1777 = vmatpush1.msra.mxu0 %v449
    %1778 = vmatprep.subr.mxu0 %v454
    %1779 = vmatpush1.msra.mxu0 %v453
    %1780 = vmatprep.subr.mxu0 %v458
    %1781 = vmatpush1.msra.mxu0 %v457
    %1782 = vmatprep.subr.mxu0 %v462
    %1783 = vmatpush1.msra.mxu0 %v461
    %1784 = vmatprep.subr.mxu0 %v466
    %1785 = vmatpush1.msra.mxu0 %v465
    %1786 = vmatprep.subr.mxu0 %v470
    %1787 = vmatpush1.msra.mxu0 %v469
    %1788 = vmatprep.subr.mxu0 0.0
    %1789 = vmatpush1.msra.mxu0 0.0
    %1790 = vmatprep.subr.mxu0 0.0
    %1791 = vmatpush1.msra.mxu0 0.0
    %1792 = vmatprep.subr.mxu0 0.0
    %1793 = vmatpush1.msra.mxu0 0.0
    %1794 = vmatprep.subr.mxu0 0.0
    %1795 = vmatpush1.msra.mxu0 0.0
    %1796 = vmatprep.subr.mxu0 0.0
    %1797 = vmatpush1.msra.mxu0 0.0
    %1798 = vmatprep.subr.mxu0 0.0
    %1799 = vmatpush1.msra.mxu0 0.0
    %1800 = vmatprep.subr.mxu0 0.0
    %1801 = vmatpush1.msra.mxu0 0.0
    %1802 = vmatprep.subr.mxu0 0.0
    %1803 = vmatpush1.msra.mxu0 0.0
    %1804 = vmatprep.subr.mxu0 0.0
    %1805 = vmatpush1.msra.mxu0 0.0
    %1806 = vmatprep.subr.mxu0 0.0
    %1807 = vmatpush1.msra.mxu0 0.0
    %1808 = vmatprep.subr.mxu0 0.0
    %1809 = vmatpush1.msra.mxu0 0.0
    %1810 = vmatprep.subr.mxu0 0.0
    %1811 = vmatpush1.msra.mxu0 0.0
    %1812 = vmatprep.subr.mxu0 0.0
    %1813 = vmatpush1.msra.mxu0 0.0
    %1814 = vmatprep.subr.mxu0 0.0
    %1815 = vmatpush1.msra.mxu0 0.0
    %1816 = vmatprep.subr.mxu0 0.0
    %1817 = vmatpush1.msra.mxu0 0.0
    %1818 = vmatprep.subr.mxu0 0.0
    %1819 = vmatpush1.msra.mxu0 0.0
    %1820 = vmatprep.mubr.f32.mxu0 0.0
    %1821 = vmatmul.mubr.f32.gmra.mrb[0].mxu0 %v1754
    %v1822 = vpop.f32.mrb[0].mxu0
    %v1823 = vadd.f32 0.0, %v1822
    %v1824 = vpop.f32.mrb[0].mxu0
    %v1825 = vadd.f32 0.0, %v1824
    %1826 = vdwg.mxu0
    %1827 = vmatprep.subr.mxu0 %v412
    %1828 = vmatpush1.msra.mxu0 %v411
    %1829 = vmatprep.subr.mxu0 %v416
    %1830 = vmatpush1.msra.mxu0 %v415
    %1831 = vmatprep.subr.mxu0 %v420
    %1832 = vmatpush1.msra.mxu0 %v419
    %1833 = vmatprep.subr.mxu0 %v424
    %1834 = vmatpush1.msra.mxu0 %v423
    %1835 = vmatprep.subr.mxu0 %v428
    %1836 = vmatpush1.msra.mxu0 %v427
    %1837 = vmatprep.subr.mxu0 %v432
    %1838 = vmatpush1.msra.mxu0 %v431
    %1839 = vmatprep.subr.mxu0 %v436
    %1840 = vmatpush1.msra.mxu0 %v435
    %1841 = vmatprep.subr.mxu0 %v440
    %1842 = vmatpush1.msra.mxu0 %v439
    %1843 = vmatprep.subr.mxu0 %v444
    %1844 = vmatpush1.msra.mxu0 %v443
    %1845 = vmatprep.subr.mxu0 %v448
    %1846 = vmatpush1.msra.mxu0 %v447
    %1847 = vmatprep.subr.mxu0 %v452
    %1848 = vmatpush1.msra.mxu0 %v451
    %1849 = vmatprep.subr.mxu0 %v456
    %1850 = vmatpush1.msra.mxu0 %v455
    %1851 = vmatprep.subr.mxu0 %v460
    %1852 = vmatpush1.msra.mxu0 %v459
    %1853 = vmatprep.subr.mxu0 %v464
    %1854 = vmatpush1.msra.mxu0 %v463
    %1855 = vmatprep.subr.mxu0 %v468
    %1856 = vmatpush1.msra.mxu0 %v467
    %1857 = vmatprep.subr.mxu0 %v472
    %1858 = vmatpush1.msra.mxu0 %v471
    %1859 = vmatprep.subr.mxu0 0.0
    %1860 = vmatpush1.msra.mxu0 0.0
    %1861 = vmatprep.subr.mxu0 0.0
    %1862 = vmatpush1.msra.mxu0 0.0
    %1863 = vmatprep.subr.mxu0 0.0
    %1864 = vmatpush1.msra.mxu0 0.0
    %1865 = vmatprep.subr.mxu0 0.0
    %1866 = vmatpush1.msra.mxu0 0.0
    %1867 = vmatprep.subr.mxu0 0.0
    %1868 = vmatpush1.msra.mxu0 0.0
    %1869 = vmatprep.subr.mxu0 0.0
    %1870 = vmatpush1.msra.mxu0 0.0
    %1871 = vmatprep.subr.mxu0 0.0
    %1872 = vmatpush1.msra.mxu0 0.0
    %1873 = vmatprep.subr.mxu0 0.0
    %1874 = vmatpush1.msra.mxu0 0.0
    %1875 = vmatprep.subr.mxu0 0.0
    %1876 = vmatpush1.msra.mxu0 0.0
    %1877 = vmatprep.subr.mxu0 0.0
    %1878 = vmatpush1.msra.mxu0 0.0
    %1879 = vmatprep.subr.mxu0 0.0
    %1880 = vmatpush1.msra.mxu0 0.0
    %1881 = vmatprep.subr.mxu0 0.0
    %1882 = vmatpush1.msra.mxu0 0.0
    %1883 = vmatprep.subr.mxu0 0.0
    %1884 = vmatpush1.msra.mxu0 0.0
    %1885 = vmatprep.subr.mxu0 0.0
    %1886 = vmatpush1.msra.mxu0 0.0
    %1887 = vmatprep.subr.mxu0 0.0
    %1888 = vmatpush1.msra.mxu0 0.0
    %1889 = vmatprep.subr.mxu0 0.0
    %1890 = vmatpush1.msra.mxu0 0.0
    %1891 = vmatprep.mubr.f32.mxu0 0.0
    %1892 = vmatmul.mubr.f32.gmra.mrb[0].mxu0 %v1754
    %v1893 = vpop.f32.mrb[0].mxu0
    %v1894 = vadd.f32 0.0, %v1893
    %v1895 = vpop.f32.mrb[0].mxu0
    %v1896 = vadd.f32 0.0, %v1895
    %1897 = vdwg.mxu0
    %v1902 = vrot.slane %v1823, 2
    %v1903 = vrot.slane %v1825, 2
    %v1904 = vrot.slane %v1894, 2
    %v1905 = vrot.slane %v1896, 2
    %v1910 = vadd.f32 %v328, %v1902
    %v1911 = vadd.f32 %v330, %v1903
    %v1912 = vadd.f32 %v405, %v1904
    %v1913 = vadd.f32 %v407, %v1905
    %v1914 = vxor.u32 %v1910, 2147483648
    %v1915 = vmul.f32 %v1914, 1.442695
    %v1916 = vpow.pop %v1915
    %v1917 = vadd.f32 %v1916, 1.0
    %v1918 = vrcp.pop %v1917
    %v1919 = vmul.f32 1.0, %v1918
    %v1920 = vxor.u32 %v1911, 2147483648
    %v1921 = vmul.f32 %v1920, 1.442695
    %v1922 = vpow.pop %v1921
    %v1923 = vadd.f32 %v1922, 1.0
    %v1924 = vrcp.pop %v1923
    %v1925 = vmul.f32 1.0, %v1924
    %v1926 = vtanh.pop %v1912
    %v1927 = vxor.u32 %v1913, 2147483648
    %v1928 = vmul.f32 %v1927, 1.442695
    %v1929 = vpow.pop %v1928
    %v1930 = vadd.f32 %v1929, 1.0
    %v1931 = vrcp.pop %v1930
    %v1932 = vmul.f32 1.0, %v1931
    %v1934 = vrot.slane %v1750, 6
    %v1936 = vmul.f32 %v1925, %v1934
    %v1937 = vmul.f32 %v1919, %v1926
    %v1938 = vadd.f32 %v1936, %v1937
    %v1939 = vtanh.pop %v1938
    %v1940 = vmul.f32 %v1932, %v1939
    %vm1941 = vcmask 269318
    %1942 = vst.msk [vmem:[#allocation8 - $0x6] sm:$0xc0] %vm1941, %v1940
    // Predicated region
    $region34: #{sentence_encoder_forward.1} parent=1 // pred_check
      _
    $region35: #{sentence_encoder_forward.1} parent=1 // pred_check_branch
      %1944 = sbr.rel (0) target = $region37
    $region36: #{sentence_encoder_forward.1} parent=1 // pred_region
      %s1946 = ssub.s32 32, 32
      %1947 = vsyncadd [#allocation4], %s1946
      %s1949 = sshll.u32 [#allocation8], 4
      %s1950 = int_to_ptr.vmem [resolvable:$true] %s1949
      %1952 = dma.vmem_to_hbm [thread:$0]  %s1950, 32, %s5, [#allocation4]
    $region37: #{sentence_encoder_forward.1} parent=1 // pred_fallthru
      _
    // Predicated region
    $region38: #{sentence_encoder_forward.1} parent=1 // pred_check
      _
    $region39: #{sentence_encoder_forward.1} parent=1 // pred_check_branch
      %1954 = sbr.rel (0) target = $region41
    $region40: #{sentence_encoder_forward.1} parent=1 // pred_region
      %1955 = dma.done [#allocation4], 32
    $region41: #{sentence_encoder_forward.1} parent=1 // pred_fallthru
      _
    %1956 = vsyncpa [#allocation3], 1
    %1957 = vsyncpa [#allocation6], 1
    %1958 = vsyncpa [#allocation4], 1

</llo_original>
